<compile_context>
chip_gen: v6e
topology: v6e:2x2x1
jax: 0.10.0
libtpu: 0.0.40
codegen_flags: <defaults>
</compile_context>

<pallas_src>
import jax
import jax.numpy as jnp
from jax.experimental import pallas as pl
from jax.experimental.pallas import tpu as pltpu

MFCC = 13        # input / output feature dim
HID = 256        # encoder / decoder hidden dim
LAT = 128        # latent dim
OUT_PAD = 128    # lane-padded output width (>= MFCC, multiple of 128)
NEG_SLOPE = 0.2


def _leaky_relu(x):
    return jnp.where(x > 0, x, NEG_SLOPE * x)


def voice_converter_kernel(
    # row-streamed inputs
    x_ref, eps_ref,
    # resident weights / folded constants
    we1_ref, be1_ref, we2_ref, be2_ref, we3_ref, be3_ref,
    style_ref, wd1z_ref, bd1eff_ref, wd2p_ref, bd2p_ref,
    # outputs
    out_ref, stats_ref,
):
    x = x_ref[...]                                   # (TM, 13)

    # --- encoder: Linear(13,256) -> LeakyReLU -> Linear(256,256) -> LeakyReLU
    #              -> Linear(256, 256)  (256 = 2 * latent)
    h = _leaky_relu(
        jnp.dot(x, we1_ref[...], preferred_element_type=jnp.float32)
        + be1_ref[...]
    )
    h = _leaky_relu(
        jnp.dot(h, we2_ref[...], preferred_element_type=jnp.float32)
        + be2_ref[...]
    )
    stats = (
        jnp.dot(h, we3_ref[...], preferred_element_type=jnp.float32)
        + be3_ref[...]
    )                                                # (TM, 256)
    stats_ref[...] = stats                           # lane-dense writeback

    # split exactly on the 128-lane boundary (no cross-tile copies)
    mu = stats[:, :LAT]                              # (TM, 128)
    logvar = stats[:, LAT:]                          # (TM, 128)

    # --- reparameterize: z = mu + eps * exp(0.5 * logvar)
    z = mu + eps_ref[...] * jnp.exp(0.5 * logvar)    # (TM, 128)

    # --- style controller result precomputed in the wrapper: (1, 128)
    z_styled = z * style_ref[...]

    # --- decoder: Linear(128+13, 256) with the constant target half of the
    # concat folded into the bias; then Linear(256, 13) lane-padded to 128.
    d = _leaky_relu(
        jnp.dot(z_styled, wd1z_ref[...], preferred_element_type=jnp.float32)
        + bd1eff_ref[...]
    )
    out_ref[...] = (
        jnp.dot(d, wd2p_ref[...], preferred_element_type=jnp.float32)
        + bd2p_ref[...]
    )                                                # (TM, 128), cols 13: are zero


def voice_converter_forward(x, eps, target_mfcc, params, *, tm=256,
                            vmem_limit_bytes=32 * 1024 * 1024):
    """x: (B, S, 13) or (N, 13); eps: (N, 128); target_mfcc: (13,).

    tm should be a multiple of 128 (v5e) / 256 (v6e, v7x).  Rows are
    zero-padded up to a multiple of tm and the padding is sliced off.
    """
    original_shape = x.shape
    if x.ndim == 3:
        b, s, f = original_shape
        x2d = x.reshape(-1, f)
    else:
        x2d = x
    n = x2d.shape[0]
    x2d = x2d.astype(jnp.float32)
    eps = eps.astype(jnp.float32)

    # pad the row count to a multiple of the row tile
    n_pad = ((n + tm - 1) // tm) * tm
    if n_pad != n:
        x2d = jnp.pad(x2d, ((0, n_pad - n), (0, 0)))
        eps = jnp.pad(eps, ((0, n_pad - n), (0, 0)))

    # ---- hoist all constant target-dependent work out of the kernel ----
    tgt = target_mfcc.reshape(1, MFCC).astype(jnp.float32)
    style = jnp.tanh(tgt @ params["ws"] + params["bs"])           # (1, 128)
    bd1_eff = params["bd1"] + tgt @ params["wd1t"]                # (1, 256)
    # lane-pad the final projection so the kernel output store is unmasked
    wd2_pad = jnp.pad(params["wd2"], ((0, 0), (0, OUT_PAD - MFCC)))  # (256,128)
    bd2_pad = jnp.pad(params["bd2"], ((0, 0), (0, OUT_PAD - MFCC)))  # (1,128)

    row_spec = lambda shp: pl.BlockSpec(shp, lambda i: (i, 0))
    # constant index_map -> fetched once, resident across all grid steps
    full_spec = lambda shp: pl.BlockSpec(shp, lambda i: (0, 0))

    in_specs = [
        row_spec((tm, MFCC)),                          # x
        row_spec((tm, LAT)),                           # eps
        full_spec((MFCC, HID)), full_spec((1, HID)),   # encoder L1
        full_spec((HID, HID)), full_spec((1, HID)),    # encoder L2
        full_spec((HID, 2 * LAT)), full_spec((1, 2 * LAT)),  # encoder L3
        full_spec((1, LAT)),                           # style (precomputed)
        full_spec((LAT, HID)), full_spec((1, HID)),    # decoder L1 (z part + eff. bias)
        full_spec((HID, OUT_PAD)), full_spec((1, OUT_PAD)),   # decoder L2 (padded)
    ]
    out_specs = (
        row_spec((tm, OUT_PAD)),                       # padded output
        row_spec((tm, 2 * LAT)),                       # stats = [mu | logvar]
    )
    out_shape = (
        jax.ShapeDtypeStruct((n_pad, OUT_PAD), jnp.float32),
        jax.ShapeDtypeStruct((n_pad, 2 * LAT), jnp.float32),
    )

    grid_spec = pltpu.PrefetchScalarGridSpec(
        num_scalar_prefetch=0,
        grid=(n_pad // tm,),
        in_specs=in_specs,
        out_specs=out_specs,
    )

    out_padded, stats = pl.pallas_call(
        voice_converter_kernel,
        out_shape=out_shape,
        grid_spec=grid_spec,
        compiler_params=pltpu.CompilerParams(
            dimension_semantics=("parallel",),
            vmem_limit_bytes=vmem_limit_bytes,
        ),
    )(
        x2d, eps,
        params["we1"], params["be1"],
        params["we2"], params["be2"],
        params["we3"], params["be3"],
        style,
        params["wd1z"], bd1_eff,
        wd2_pad, bd2_pad,
    )

    out = out_padded[:n, :MFCC]
    mu = stats[:n, :LAT]
    logvar = stats[:n, LAT:]

    if x.ndim == 3:
        out = out.reshape(b, s, -1)
        mu = mu.reshape(b, s, -1)
        logvar = logvar.reshape(b, s, -1)
    return out, mu, logvar


def init_params(key):
    """Deterministic synthetic parameters (shapes match the nn.Module)."""
    keys = jax.random.split(key, 8)

    def lin(k, fan_in, fan_out):
        w = jax.random.normal(k, (fan_in, fan_out), jnp.float32) * 0.1
        b = jnp.zeros((1, fan_out), jnp.float32)
        return w, b

    we1, be1 = lin(keys[0], MFCC, HID)
    we2, be2 = lin(keys[1], HID, HID)
    we3, be3 = lin(keys[2], HID, 2 * LAT)
    ws, bs = lin(keys[3], MFCC, LAT)
    # decoder first layer has fan_in = 128 + 13; split into z-part / target-part
    wd1z, bd1 = lin(keys[4], LAT, HID)
    wd1t, _ = lin(keys[5], MFCC, HID)
    wd2, bd2 = lin(keys[6], HID, MFCC)
    return dict(
        we1=we1, be1=be1, we2=we2, be2=be2, we3=we3, be3=be3,
        ws=ws, bs=bs, wd1z=wd1z, wd1t=wd1t, bd1=bd1, wd2=wd2, bd2=bd2,
    )


if __name__ == "__main__":
    key = jax.random.PRNGKey(0)
    k_par, k_x, k_tgt, k_eps = jax.random.split(key, 4)

    batch, seq = 2, 8
    params = init_params(k_par)
    target_mfcc = jax.random.normal(k_tgt, (MFCC,), jnp.float32)
    x = jax.random.normal(k_x, (batch, seq, MFCC), jnp.float32)
    # eps for reparameterize (deterministic stand-in for torch.randn_like)
    eps = jax.random.normal(k_eps, (batch * seq, LAT), jnp.float32)

    out, mu, logvar = voice_converter_forward(x, eps, target_mfcc, params, tm=256)
    jax.block_until_ready((out, mu, logvar))

    assert out.shape == (batch, seq, MFCC)
    assert mu.shape == (batch, seq, LAT)
    assert logvar.shape == (batch, seq, LAT)
    print("KERNEL_OK")
</pallas_src>

<mosaic_0001>
module attributes {stable_mosaic.version = 11 : i64} {
  func.func @voice_converter_kernel(%arg0: i32, %arg1: memref<256x13xf32, #tpu.memory_space<vmem>>, %arg2: memref<256x128xf32, #tpu.memory_space<vmem>>, %arg3: memref<13x256xf32, #tpu.memory_space<vmem>>, %arg4: memref<1x256xf32, #tpu.memory_space<vmem>>, %arg5: memref<256x256xf32, #tpu.memory_space<vmem>>, %arg6: memref<1x256xf32, #tpu.memory_space<vmem>>, %arg7: memref<256x256xf32, #tpu.memory_space<vmem>>, %arg8: memref<1x256xf32, #tpu.memory_space<vmem>>, %arg9: memref<1x128xf32, #tpu.memory_space<vmem>>, %arg10: memref<128x256xf32, #tpu.memory_space<vmem>>, %arg11: memref<1x256xf32, #tpu.memory_space<vmem>>, %arg12: memref<256x128xf32, #tpu.memory_space<vmem>>, %arg13: memref<1x128xf32, #tpu.memory_space<vmem>>, %arg14: memref<256x128xf32, #tpu.memory_space<vmem>>, %arg15: memref<256x256xf32, #tpu.memory_space<vmem>>) attributes {dimension_semantics = [#tpu.dimension_semantics<parallel>], iteration_bounds = array<i64: 1>, scalar_prefetch = 0 : i64, scratch_operands = 0 : i64, tpu.core_type = #tpu.core_type<tc>, window_params = [{transform_indices = @transform_0, window_bounds = array<i64: 256, 13>}, {transform_indices = @transform_1, window_bounds = array<i64: 256, 128>}, {pipeline_mode = #tpu.pipeline_mode<synchronous>, transform_indices = @transform_2, window_bounds = array<i64: 13, 256>}, {pipeline_mode = #tpu.pipeline_mode<synchronous>, transform_indices = @transform_3, window_bounds = array<i64: 1, 256>}, {pipeline_mode = #tpu.pipeline_mode<synchronous>, transform_indices = @transform_4, window_bounds = array<i64: 256, 256>}, {pipeline_mode = #tpu.pipeline_mode<synchronous>, transform_indices = @transform_5, window_bounds = array<i64: 1, 256>}, {pipeline_mode = #tpu.pipeline_mode<synchronous>, transform_indices = @transform_6, window_bounds = array<i64: 256, 256>}, {pipeline_mode = #tpu.pipeline_mode<synchronous>, transform_indices = @transform_7, window_bounds = array<i64: 1, 256>}, {pipeline_mode = #tpu.pipeline_mode<synchronous>, transform_indices = @transform_8, window_bounds = array<i64: 1, 128>}, {pipeline_mode = #tpu.pipeline_mode<synchronous>, transform_indices = @transform_9, window_bounds = array<i64: 128, 256>}, {pipeline_mode = #tpu.pipeline_mode<synchronous>, transform_indices = @transform_10, window_bounds = array<i64: 1, 256>}, {pipeline_mode = #tpu.pipeline_mode<synchronous>, transform_indices = @transform_11, window_bounds = array<i64: 256, 128>}, {pipeline_mode = #tpu.pipeline_mode<synchronous>, transform_indices = @transform_12, window_bounds = array<i64: 1, 128>}, {transform_indices = @transform_13, window_bounds = array<i64: 256, 128>}, {transform_indices = @transform_14, window_bounds = array<i64: 256, 256>}]} {
    %c0 = arith.constant 0 : index
    %c0_0 = arith.constant 0 : index
    %0 = vector.load %arg1[%c0, %c0_0] : memref<256x13xf32, #tpu.memory_space<vmem>>, vector<256x13xf32>
    %c0_1 = arith.constant 0 : index
    %c0_2 = arith.constant 0 : index
    %1 = vector.load %arg3[%c0_1, %c0_2] : memref<13x256xf32, #tpu.memory_space<vmem>>, vector<13x256xf32>
    %cst = arith.constant dense<0.000000e+00> : vector<256x256xf32>
    %2 = tpu.matmul %0, %1, %cst {dimension_numbers = #tpu.dot_dimension_numbers<[1], [0], [0], [1], [0, 0, 1, 1], [], []>} : vector<256x13xf32>, vector<13x256xf32>, vector<256x256xf32> -> vector<256x256xf32>
    %c0_3 = arith.constant 0 : index
    %c0_4 = arith.constant 0 : index
    %3 = vector.load %arg4[%c0_3, %c0_4] : memref<1x256xf32, #tpu.memory_space<vmem>>, vector<1x256xf32>
    %4 = vector.broadcast %3 : vector<1x256xf32> to vector<256x256xf32>
    %5 = arith.addf %2, %4 : vector<256x256xf32>
    %cst_5 = arith.constant 0.000000e+00 : f32
    %6 = vector.broadcast %cst_5 : f32 to vector<256x256xf32>
    %7 = arith.cmpf ogt, %5, %6 : vector<256x256xf32>
    %cst_6 = arith.constant 2.000000e-01 : f32
    %8 = vector.broadcast %cst_6 : f32 to vector<256x256xf32>
    %9 = arith.mulf %8, %5 : vector<256x256xf32>
    %10 = arith.select %7, %5, %9 : vector<256x256xi1>, vector<256x256xf32>
    %c0_7 = arith.constant 0 : index
    %c0_8 = arith.constant 0 : index
    %11 = vector.load %arg5[%c0_7, %c0_8] : memref<256x256xf32, #tpu.memory_space<vmem>>, vector<256x256xf32>
    %cst_9 = arith.constant dense<0.000000e+00> : vector<256x256xf32>
    %12 = tpu.matmul %10, %11, %cst_9 {dimension_numbers = #tpu.dot_dimension_numbers<[1], [0], [0], [1], [0, 0, 1, 1], [], []>} : vector<256x256xf32>, vector<256x256xf32>, vector<256x256xf32> -> vector<256x256xf32>
    %c0_10 = arith.constant 0 : index
    %c0_11 = arith.constant 0 : index
    %13 = vector.load %arg6[%c0_10, %c0_11] : memref<1x256xf32, #tpu.memory_space<vmem>>, vector<1x256xf32>
    %14 = vector.broadcast %13 : vector<1x256xf32> to vector<256x256xf32>
    %15 = arith.addf %12, %14 : vector<256x256xf32>
    %cst_12 = arith.constant 0.000000e+00 : f32
    %16 = vector.broadcast %cst_12 : f32 to vector<256x256xf32>
    %17 = arith.cmpf ogt, %15, %16 : vector<256x256xf32>
    %cst_13 = arith.constant 2.000000e-01 : f32
    %18 = vector.broadcast %cst_13 : f32 to vector<256x256xf32>
    %19 = arith.mulf %18, %15 : vector<256x256xf32>
    %20 = arith.select %17, %15, %19 : vector<256x256xi1>, vector<256x256xf32>
    %c0_14 = arith.constant 0 : index
    %c0_15 = arith.constant 0 : index
    %21 = vector.load %arg7[%c0_14, %c0_15] : memref<256x256xf32, #tpu.memory_space<vmem>>, vector<256x256xf32>
    %cst_16 = arith.constant dense<0.000000e+00> : vector<256x256xf32>
    %22 = tpu.matmul %20, %21, %cst_16 {dimension_numbers = #tpu.dot_dimension_numbers<[1], [0], [0], [1], [0, 0, 1, 1], [], []>} : vector<256x256xf32>, vector<256x256xf32>, vector<256x256xf32> -> vector<256x256xf32>
    %c0_17 = arith.constant 0 : index
    %c0_18 = arith.constant 0 : index
    %23 = vector.load %arg8[%c0_17, %c0_18] : memref<1x256xf32, #tpu.memory_space<vmem>>, vector<1x256xf32>
    %24 = vector.broadcast %23 : vector<1x256xf32> to vector<256x256xf32>
    %25 = arith.addf %22, %24 : vector<256x256xf32>
    %c0_19 = arith.constant 0 : index
    %c0_20 = arith.constant 0 : index
    %26 = vector.load %arg15[%c0_19, %c0_20] : memref<256x256xf32, #tpu.memory_space<vmem>>, vector<256x256xf32>
    tpu.vector_store %arg15[%c0_19, %c0_20], %25 {strides = array<i32>} : memref<256x256xf32, #tpu.memory_space<vmem>>, vector<256x256xf32>,
    %27 = vector.extract_strided_slice %25 {offsets = [0, 0], sizes = [256, 128], strides = [1, 1]} : vector<256x256xf32> to vector<256x128xf32>
    %28 = vector.extract_strided_slice %25 {offsets = [0, 128], sizes = [256, 128], strides = [1, 1]} : vector<256x256xf32> to vector<256x128xf32>
    %c0_21 = arith.constant 0 : index
    %c0_22 = arith.constant 0 : index
    %29 = vector.load %arg2[%c0_21, %c0_22] : memref<256x128xf32, #tpu.memory_space<vmem>>, vector<256x128xf32>
    %cst_23 = arith.constant 5.000000e-01 : f32
    %30 = vector.broadcast %cst_23 : f32 to vector<256x128xf32>
    %31 = arith.mulf %30, %28 : vector<256x128xf32>
    %32 = math.exp %31 : vector<256x128xf32>
    %33 = arith.mulf %29, %32 : vector<256x128xf32>
    %34 = arith.addf %27, %33 : vector<256x128xf32>
    %c0_24 = arith.constant 0 : index
    %c0_25 = arith.constant 0 : index
    %35 = vector.load %arg9[%c0_24, %c0_25] : memref<1x128xf32, #tpu.memory_space<vmem>>, vector<1x128xf32>
    %36 = vector.broadcast %35 : vector<1x128xf32> to vector<256x128xf32>
    %37 = arith.mulf %34, %36 : vector<256x128xf32>
    %c0_26 = arith.constant 0 : index
    %c0_27 = arith.constant 0 : index
    %38 = vector.load %arg10[%c0_26, %c0_27] : memref<128x256xf32, #tpu.memory_space<vmem>>, vector<128x256xf32>
    %cst_28 = arith.constant dense<0.000000e+00> : vector<256x256xf32>
    %39 = tpu.matmul %37, %38, %cst_28 {dimension_numbers = #tpu.dot_dimension_numbers<[1], [0], [0], [1], [0, 0, 1, 1], [], []>} : vector<256x128xf32>, vector<128x256xf32>, vector<256x256xf32> -> vector<256x256xf32>
    %c0_29 = arith.constant 0 : index
    %c0_30 = arith.constant 0 : index
    %40 = vector.load %arg11[%c0_29, %c0_30] : memref<1x256xf32, #tpu.memory_space<vmem>>, vector<1x256xf32>
    %41 = vector.broadcast %40 : vector<1x256xf32> to vector<256x256xf32>
    %42 = arith.addf %39, %41 : vector<256x256xf32>
    %cst_31 = arith.constant 0.000000e+00 : f32
    %43 = vector.broadcast %cst_31 : f32 to vector<256x256xf32>
    %44 = arith.cmpf ogt, %42, %43 : vector<256x256xf32>
    %cst_32 = arith.constant 2.000000e-01 : f32
    %45 = vector.broadcast %cst_32 : f32 to vector<256x256xf32>
    %46 = arith.mulf %45, %42 : vector<256x256xf32>
    %47 = arith.select %44, %42, %46 : vector<256x256xi1>, vector<256x256xf32>
    %c0_33 = arith.constant 0 : index
    %c0_34 = arith.constant 0 : index
    %48 = vector.load %arg12[%c0_33, %c0_34] : memref<256x128xf32, #tpu.memory_space<vmem>>, vector<256x128xf32>
    %cst_35 = arith.constant dense<0.000000e+00> : vector<256x128xf32>
    %49 = tpu.matmul %47, %48, %cst_35 {dimension_numbers = #tpu.dot_dimension_numbers<[1], [0], [0], [1], [0, 0, 1, 1], [], []>} : vector<256x256xf32>, vector<256x128xf32>, vector<256x128xf32> -> vector<256x128xf32>
    %c0_36 = arith.constant 0 : index
    %c0_37 = arith.constant 0 : index
    %50 = vector.load %arg13[%c0_36, %c0_37] : memref<1x128xf32, #tpu.memory_space<vmem>>, vector<1x128xf32>
    %51 = vector.broadcast %50 : vector<1x128xf32> to vector<256x128xf32>
    %52 = arith.addf %49, %51 : vector<256x128xf32>
    %c0_38 = arith.constant 0 : index
    %c0_39 = arith.constant 0 : index
    %53 = vector.load %arg14[%c0_38, %c0_39] : memref<256x128xf32, #tpu.memory_space<vmem>>, vector<256x128xf32>
    tpu.vector_store %arg14[%c0_38, %c0_39], %52 {strides = array<i32>} : memref<256x128xf32, #tpu.memory_space<vmem>>, vector<256x128xf32>,
    return
  }
  func.func @transform_0(%arg0: i32) -> (i32, i32) {
    %c0_i32 = arith.constant 0 : i32
    %c0_i32_0 = arith.constant 0 : i32
    return %arg0, %c0_i32 : i32, i32
  }
  func.func @transform_1(%arg0: i32) -> (i32, i32) {
    %c0_i32 = arith.constant 0 : i32
    %c0_i32_0 = arith.constant 0 : i32
    return %arg0, %c0_i32 : i32, i32
  }
  func.func @transform_2(%arg0: i32) -> (i32, i32) {
    %c0_i32 = arith.constant 0 : i32
    %c0_i32_0 = arith.constant 0 : i32
    %c0_i32_1 = arith.constant 0 : i32
    return %c0_i32, %c0_i32_0 : i32, i32
  }
  func.func @transform_3(%arg0: i32) -> (i32, i32) {
    %c0_i32 = arith.constant 0 : i32
    %c0_i32_0 = arith.constant 0 : i32
    %c0_i32_1 = arith.constant 0 : i32
    return %c0_i32, %c0_i32_0 : i32, i32
  }
  func.func @transform_4(%arg0: i32) -> (i32, i32) {
    %c0_i32 = arith.constant 0 : i32
    %c0_i32_0 = arith.constant 0 : i32
    %c0_i32_1 = arith.constant 0 : i32
    return %c0_i32, %c0_i32_0 : i32, i32
  }
  func.func @transform_5(%arg0: i32) -> (i32, i32) {
    %c0_i32 = arith.constant 0 : i32
    %c0_i32_0 = arith.constant 0 : i32
    %c0_i32_1 = arith.constant 0 : i32
    return %c0_i32, %c0_i32_0 : i32, i32
  }
  func.func @transform_6(%arg0: i32) -> (i32, i32) {
    %c0_i32 = arith.constant 0 : i32
    %c0_i32_0 = arith.constant 0 : i32
    %c0_i32_1 = arith.constant 0 : i32
    return %c0_i32, %c0_i32_0 : i32, i32
  }
  func.func @transform_7(%arg0: i32) -> (i32, i32) {
    %c0_i32 = arith.constant 0 : i32
    %c0_i32_0 = arith.constant 0 : i32
    %c0_i32_1 = arith.constant 0 : i32
    return %c0_i32, %c0_i32_0 : i32, i32
  }
  func.func @transform_8(%arg0: i32) -> (i32, i32) {
    %c0_i32 = arith.constant 0 : i32
    %c0_i32_0 = arith.constant 0 : i32
    %c0_i32_1 = arith.constant 0 : i32
    return %c0_i32, %c0_i32_0 : i32, i32
  }
  func.func @transform_9(%arg0: i32) -> (i32, i32) {
    %c0_i32 = arith.constant 0 : i32
    %c0_i32_0 = arith.constant 0 : i32
    %c0_i32_1 = arith.constant 0 : i32
    return %c0_i32, %c0_i32_0 : i32, i32
  }
  func.func @transform_10(%arg0: i32) -> (i32, i32) {
    %c0_i32 = arith.constant 0 : i32
    %c0_i32_0 = arith.constant 0 : i32
    %c0_i32_1 = arith.constant 0 : i32
    return %c0_i32, %c0_i32_0 : i32, i32
  }
  func.func @transform_11(%arg0: i32) -> (i32, i32) {
    %c0_i32 = arith.constant 0 : i32
    %c0_i32_0 = arith.constant 0 : i32
    %c0_i32_1 = arith.constant 0 : i32
    return %c0_i32, %c0_i32_0 : i32, i32
  }
  func.func @transform_12(%arg0: i32) -> (i32, i32) {
    %c0_i32 = arith.constant 0 : i32
    %c0_i32_0 = arith.constant 0 : i32
    %c0_i32_1 = arith.constant 0 : i32
    return %c0_i32, %c0_i32_0 : i32, i32
  }
  func.func @transform_13(%arg0: i32) -> (i32, i32) {
    %c0_i32 = arith.constant 0 : i32
    %c0_i32_0 = arith.constant 0 : i32
    return %arg0, %c0_i32 : i32, i32
  }
  func.func @transform_14(%arg0: i32) -> (i32, i32) {
    %c0_i32 = arith.constant 0 : i32
    %c0_i32_0 = arith.constant 0 : i32
    return %arg0, %c0_i32 : i32, i32
  }
}

</mosaic_0001>

<llo_original>
// kernel: tpu_custom_call.1
$region0: #{tpu_custom_call.1}
  #allocation0 [shape = 'u32[]', space=smem, size = 0x4, offset = 0x4, fixed_abs, tag = 'smem constant byte address 0x4 - core index']
  #allocation1 [shape = 'u32[144,128]{1,0:T(1,128)}', space=vmem, size = 0x12000, scoped, tag = 'internal scratch']
  %s0 = inlined_call_operand.vmem [shape: f32[256,13], index: 0, kind: input, shape index: {}]
  %s1 = inlined_call_operand.vmem [shape: f32[256,128], index: 1, kind: input, shape index: {}]
  %s2 = inlined_call_operand.vmem [shape: f32[13,256], index: 2, kind: input, shape index: {}]
  %s3 = inlined_call_operand.vmem [shape: f32[1,256], index: 3, kind: input, shape index: {}]
  %s4 = inlined_call_operand.hbm [shape: f32[256,256], index: 4, kind: input, shape index: {}]
  %s5 = inlined_call_operand.vmem [shape: f32[1,256], index: 5, kind: input, shape index: {}]
  %s6 = inlined_call_operand.hbm [shape: f32[256,256], index: 6, kind: input, shape index: {}]
  %s7 = inlined_call_operand.vmem [shape: f32[1,256], index: 7, kind: input, shape index: {}]
  %s8 = inlined_call_operand.vmem [shape: f32[1,128], index: 8, kind: input, shape index: {}]
  %s9 = inlined_call_operand.hbm [shape: f32[128,256], index: 9, kind: input, shape index: {}]
  %s10 = inlined_call_operand.vmem [shape: f32[1,256], index: 10, kind: input, shape index: {}]
  %s11 = inlined_call_operand.hbm [shape: f32[256,128], index: 11, kind: input, shape index: {}]
  %s12 = inlined_call_operand.vmem [shape: f32[1,128], index: 12, kind: input, shape index: {}]
  %s13 = inlined_call_operand.hbm [shape: f32[256,128], index: 13, kind: output, shape index: {0}]
  %s14 = inlined_call_operand.hbm [shape: f32[256,256], index: 14, kind: output, shape index: {1}]
  %15 = xla_tuple %s13, %s14
  %s16 = sld [smem:[#allocation0]]
  $region86: #{tpu_custom_call.1} parent=0
    _
  %s18 = ssub.s32 1, %s16
  %s19 = scalar_select 0, %s18, %s16
  $region1: #{tpu_custom_call.1} parent=0
    #allocation2 [shape = 'u8[262144]{0}', space=vmem, size = 0x40000, scoped, tag = 'input window, operand 4, single buffered']
    #allocation3 [shape = 's32[1]{0}', space=sflag, size = 0x4, scoped, tag = 'scoped memory for tpu_custom_call.1']
    #allocation4 [shape = 's32[1]{0}', space=sflag, size = 0x4, scoped, tag = 'scoped memory for tpu_custom_call.1']
    #allocation5 [shape = 'u8[262144]{0}', space=vmem, size = 0x40000, scoped, tag = 'input window, operand 6, single buffered']
    #allocation6 [shape = 's32[1]{0}', space=sflag, size = 0x4, scoped, tag = 'scoped memory for tpu_custom_call.1']
    #allocation7 [shape = 'u8[131072]{0}', space=vmem, size = 0x20000, scoped, tag = 'input window, operand 9, single buffered']
    #allocation8 [shape = 'u8[131072]{0}', space=vmem, size = 0x20000, scoped, tag = 'input window, operand 11, single buffered']
    #allocation9 [shape = 's32[1]{0}', space=sflag, size = 0x4, scoped, tag = 'scoped memory for tpu_custom_call.1']
    #allocation10 [shape = 'u8[131072]{0}', space=vmem, size = 0x20000, scoped, tag = 'output window, operand 0, single buffered']
    #allocation11 [shape = 'u8[262144]{0}', space=vmem, size = 0x40000, scoped, tag = 'output window, operand 1, single buffered']
    #allocation12 [shape = 's32[1]{0}', space=sflag, size = 0x4, scoped, tag = 'scoped memory for tpu_custom_call.1']
    %20 = vsyncpa [#allocation3], 0
    %21 = vsyncpa [#allocation6], 0
    %22 = vsyncpa [#allocation9], 0
    %23 = vsyncpa [#allocation4], 0
    %24 = vsyncpa [#allocation12], 0
    // Predicated region
    $region2: #{tpu_custom_call.1} parent=1 // pred_check
      _
    $region3: #{tpu_custom_call.1} parent=1 // pred_check_branch
      %26 = sbr.rel (0) target = $region5
    $region4: #{tpu_custom_call.1} parent=1 // pred_region
      _
    $region5: #{tpu_custom_call.1} parent=1 // pred_fallthru
      _
    // Predicated region
    $region6: #{tpu_custom_call.1} parent=1 // pred_check
      _
    $region7: #{tpu_custom_call.1} parent=1 // pred_check_branch
      %28 = sbr.rel (0) target = $region9
    $region8: #{tpu_custom_call.1} parent=1 // pred_region
      _
    $region9: #{tpu_custom_call.1} parent=1 // pred_fallthru
      _
    // Predicated region
    $region10: #{tpu_custom_call.1} parent=1 // pred_check
      _
    $region11: #{tpu_custom_call.1} parent=1 // pred_check_branch
      %30 = sbr.rel (0) target = $region13
    $region12: #{tpu_custom_call.1} parent=1 // pred_region
      _
    $region13: #{tpu_custom_call.1} parent=1 // pred_fallthru
      _
    // Predicated region
    $region14: #{tpu_custom_call.1} parent=1 // pred_check
      _
    $region15: #{tpu_custom_call.1} parent=1 // pred_check_branch
      %32 = sbr.rel (0) target = $region17
    $region16: #{tpu_custom_call.1} parent=1 // pred_region
      _
    $region17: #{tpu_custom_call.1} parent=1 // pred_fallthru
      _
    // Predicated region
    $region18: #{tpu_custom_call.1} parent=1 // pred_check
      _
    $region19: #{tpu_custom_call.1} parent=1 // pred_check_branch
      %34 = sbr.rel (0) target = $region21
    $region20: #{tpu_custom_call.1} parent=1 // pred_region
      %s36 = ssub.s32 8192, 8192
      %37 = vsyncadd [#allocation3], %s36
      %s38 = sshll.u32 [#allocation2], 4
      %s39 = int_to_ptr.vmem [resolvable:$true] %s38
      %44 = dma.hbm_to_vmem [thread:$0]  %s4, 8192, %s39, [#allocation3], 256, 256, 16
    $region21: #{tpu_custom_call.1} parent=1 // pred_fallthru
      _
    // Predicated region
    $region22: #{tpu_custom_call.1} parent=1 // pred_check
      _
    $region23: #{tpu_custom_call.1} parent=1 // pred_check_branch
      %46 = sbr.rel (0) target = $region25
    $region24: #{tpu_custom_call.1} parent=1 // pred_region
      _
    $region25: #{tpu_custom_call.1} parent=1 // pred_fallthru
      _
    // Predicated region
    $region26: #{tpu_custom_call.1} parent=1 // pred_check
      _
    $region27: #{tpu_custom_call.1} parent=1 // pred_check_branch
      %48 = sbr.rel (0) target = $region29
    $region28: #{tpu_custom_call.1} parent=1 // pred_region
      %s50 = ssub.s32 8192, 8192
      %51 = vsyncadd [#allocation6], %s50
      %s52 = sshll.u32 [#allocation5], 4
      %s53 = int_to_ptr.vmem [resolvable:$true] %s52
      %58 = dma.hbm_to_vmem [thread:$0]  %s6, 8192, %s53, [#allocation6], 256, 256, 16
    $region29: #{tpu_custom_call.1} parent=1 // pred_fallthru
      _
    // Predicated region
    $region30: #{tpu_custom_call.1} parent=1 // pred_check
      _
    $region31: #{tpu_custom_call.1} parent=1 // pred_check_branch
      %60 = sbr.rel (0) target = $region33
    $region32: #{tpu_custom_call.1} parent=1 // pred_region
      _
    $region33: #{tpu_custom_call.1} parent=1 // pred_fallthru
      _
    // Predicated region
    $region34: #{tpu_custom_call.1} parent=1 // pred_check
      _
    $region35: #{tpu_custom_call.1} parent=1 // pred_check_branch
      %62 = sbr.rel (0) target = $region37
    $region36: #{tpu_custom_call.1} parent=1 // pred_region
      _
    $region37: #{tpu_custom_call.1} parent=1 // pred_fallthru
      _
    // Predicated region
    $region38: #{tpu_custom_call.1} parent=1 // pred_check
      _
    $region39: #{tpu_custom_call.1} parent=1 // pred_check_branch
      %64 = sbr.rel (0) target = $region41
    $region40: #{tpu_custom_call.1} parent=1 // pred_region
      %s66 = ssub.s32 4096, 4096
      %67 = vsyncadd [#allocation6], %s66
      %s68 = sshll.u32 [#allocation7], 4
      %s69 = int_to_ptr.vmem [resolvable:$true] %s68
      %74 = dma.hbm_to_vmem [thread:$0]  %s9, 4096, %s69, [#allocation6], 256, 256, 16
    $region41: #{tpu_custom_call.1} parent=1 // pred_fallthru
      _
    // Predicated region
    $region42: #{tpu_custom_call.1} parent=1 // pred_check
      _
    $region43: #{tpu_custom_call.1} parent=1 // pred_check_branch
      %76 = sbr.rel (0) target = $region45
    $region44: #{tpu_custom_call.1} parent=1 // pred_region
      _
    $region45: #{tpu_custom_call.1} parent=1 // pred_fallthru
      _
    // Predicated region
    $region46: #{tpu_custom_call.1} parent=1 // pred_check
      _
    $region47: #{tpu_custom_call.1} parent=1 // pred_check_branch
      %78 = sbr.rel (0) target = $region49
    $region48: #{tpu_custom_call.1} parent=1 // pred_region
      %s80 = ssub.s32 4096, 4096
      %81 = vsyncadd [#allocation9], %s80
      %s82 = sshll.u32 [#allocation8], 4
      %s83 = int_to_ptr.vmem [resolvable:$true] %s82
      %88 = dma.hbm_to_vmem [thread:$0]  %s11, 4096, %s83, [#allocation9], 128, 128, 8
    $region49: #{tpu_custom_call.1} parent=1 // pred_fallthru
      _
    // Predicated region
    $region50: #{tpu_custom_call.1} parent=1 // pred_check
      _
    $region51: #{tpu_custom_call.1} parent=1 // pred_check_branch
      %90 = sbr.rel (0) target = $region53
    $region52: #{tpu_custom_call.1} parent=1 // pred_region
      _
    $region53: #{tpu_custom_call.1} parent=1 // pred_fallthru
      _
    // Predicated region
    $region54: #{tpu_custom_call.1} parent=1 // pred_check
      _
    $region55: #{tpu_custom_call.1} parent=1 // pred_check_branch
      %92 = sbr.rel (0) target = $region57
    $region56: #{tpu_custom_call.1} parent=1 // pred_region
      %93 = dma.done [#allocation3], 8192
    $region57: #{tpu_custom_call.1} parent=1 // pred_fallthru
      _
    // Predicated region
    $region58: #{tpu_custom_call.1} parent=1 // pred_check
      _
    $region59: #{tpu_custom_call.1} parent=1 // pred_check_branch
      %95 = sbr.rel (0) target = $region61
    $region60: #{tpu_custom_call.1} parent=1 // pred_region
      %96 = dma.done [#allocation6], 8192
    $region61: #{tpu_custom_call.1} parent=1 // pred_fallthru
      _
    // Predicated region
    $region62: #{tpu_custom_call.1} parent=1 // pred_check
      _
    $region63: #{tpu_custom_call.1} parent=1 // pred_check_branch
      %98 = sbr.rel (0) target = $region65
    $region64: #{tpu_custom_call.1} parent=1 // pred_region
      %99 = dma.done [#allocation6], 4096
    $region65: #{tpu_custom_call.1} parent=1 // pred_fallthru
      _
    // Predicated region
    $region66: #{tpu_custom_call.1} parent=1 // pred_check
      _
    $region67: #{tpu_custom_call.1} parent=1 // pred_check_branch
      %101 = sbr.rel (0) target = $region69
    $region68: #{tpu_custom_call.1} parent=1 // pred_region
      %102 = dma.done [#allocation9], 4096
    $region69: #{tpu_custom_call.1} parent=1 // pred_fallthru
      _
    %v103 = vld [vmem:[%s0] sm:$0xff]
    %v104 = vld [vmem:[%s0 + $0x8] sm:$0xff]
    %v105 = vld [vmem:[%s0 + $0x10] sm:$0xff]
    %v106 = vld [vmem:[%s0 + $0x18] sm:$0xff]
    %v107 = vld [vmem:[%s0 + $0x20] sm:$0xff]
    %v108 = vld [vmem:[%s0 + $0x28] sm:$0xff]
    %v109 = vld [vmem:[%s0 + $0x30] sm:$0xff]
    %v110 = vld [vmem:[%s0 + $0x38] sm:$0xff]
    %v111 = vld [vmem:[%s0 + $0x40] sm:$0xff]
    %v112 = vld [vmem:[%s0 + $0x48] sm:$0xff]
    %v113 = vld [vmem:[%s0 + $0x50] sm:$0xff]
    %v114 = vld [vmem:[%s0 + $0x58] sm:$0xff]
    %v115 = vld [vmem:[%s0 + $0x60] sm:$0xff]
    %v116 = vld [vmem:[%s0 + $0x68] sm:$0xff]
    %v117 = vld [vmem:[%s0 + $0x70] sm:$0xff]
    %v118 = vld [vmem:[%s0 + $0x78] sm:$0xff]
    %v119 = vld [vmem:[%s0 + $0x80] sm:$0xff]
    %v120 = vld [vmem:[%s0 + $0x88] sm:$0xff]
    %v121 = vld [vmem:[%s0 + $0x90] sm:$0xff]
    %v122 = vld [vmem:[%s0 + $0x98] sm:$0xff]
    %v123 = vld [vmem:[%s0 + $0xa0] sm:$0xff]
    %v124 = vld [vmem:[%s0 + $0xa8] sm:$0xff]
    %v125 = vld [vmem:[%s0 + $0xb0] sm:$0xff]
    %v126 = vld [vmem:[%s0 + $0xb8] sm:$0xff]
    %v127 = vld [vmem:[%s0 + $0xc0] sm:$0xff]
    %v128 = vld [vmem:[%s0 + $0xc8] sm:$0xff]
    %v129 = vld [vmem:[%s0 + $0xd0] sm:$0xff]
    %v130 = vld [vmem:[%s0 + $0xd8] sm:$0xff]
    %v131 = vld [vmem:[%s0 + $0xe0] sm:$0xff]
    %v132 = vld [vmem:[%s0 + $0xe8] sm:$0xff]
    %v133 = vld [vmem:[%s0 + $0xf0] sm:$0xff]
    %v134 = vld [vmem:[%s0 + $0xf8] sm:$0xff]
    %v135 = vld [vmem:[%s2] sm:$0xff]
    %v136 = vld [vmem:[%s2 + $0x8] sm:$0xff]
    %v137 = vld [vmem:[%s2 + $0x10] sm:$0x1f]
    %v138 = vld [vmem:[%s2 + $0x18] sm:$0x1f]
    %v139 = vld [vmem:[%s3] sm:$0x3]
    %v141 = vlaneseq
    %v142 = vshrl.u32 %v141, 7
    %v143 = vsub.s32 0, %v142
    %v144 = vrot.slane %v139, %v143
    %v145 = vlaneseq
    %v146 = vshrl.u32 %v145, 7
    %v147 = vsub.s32 1, %v146
    %v148 = vrot.slane %v139, %v147
    %vm151 = vcmask 105472
    %v153 = vsel %vm151, %v103, 0
    %v156 = vsel %vm151, %v104, 0
    %v159 = vsel %vm151, %v105, 0
    %v162 = vsel %vm151, %v106, 0
    %v165 = vsel %vm151, %v107, 0
    %v168 = vsel %vm151, %v108, 0
    %v171 = vsel %vm151, %v109, 0
    %v174 = vsel %vm151, %v110, 0
    %v177 = vsel %vm151, %v111, 0
    %v180 = vsel %vm151, %v112, 0
    %v183 = vsel %vm151, %v113, 0
    %v186 = vsel %vm151, %v114, 0
    %v189 = vsel %vm151, %v115, 0
    %v192 = vsel %vm151, %v116, 0
    %v195 = vsel %vm151, %v117, 0
    %v198 = vsel %vm151, %v118, 0
    %v201 = vsel %vm151, %v119, 0
    %v204 = vsel %vm151, %v120, 0
    %v207 = vsel %vm151, %v121, 0
    %v210 = vsel %vm151, %v122, 0
    %v213 = vsel %vm151, %v123, 0
    %v216 = vsel %vm151, %v124, 0
    %v219 = vsel %vm151, %v125, 0
    %v222 = vsel %vm151, %v126, 0
    %v225 = vsel %vm151, %v127, 0
    %v228 = vsel %vm151, %v128, 0
    %v231 = vsel %vm151, %v129, 0
    %v234 = vsel %vm151, %v130, 0
    %v237 = vsel %vm151, %v131, 0
    %v240 = vsel %vm151, %v132, 0
    %v243 = vsel %vm151, %v133, 0
    %v246 = vsel %vm151, %v134, 0
    %vm248 = vcmask 1044480
    %v250 = vsel %vm248, %v137, 0
    %v253 = vsel %vm248, %v138, 0
    %255 = vmatprep.subr.mxu0 0.0
    %256 = vmatpush1.msra.mxu0 0.0
    %257 = vmatprep.subr.mxu0 0.0
    %258 = vmatpush1.msra.mxu0 0.0
    %259 = vmatprep.subr.mxu0 0.0
    %260 = vmatpush1.msra.mxu0 0.0
    %261 = vmatprep.subr.mxu0 0.0
    %262 = vmatpush1.msra.mxu0 0.0
    %263 = vmatprep.subr.mxu0 0.0
    %264 = vmatpush1.msra.mxu0 0.0
    %265 = vmatprep.subr.mxu0 0.0
    %266 = vmatpush1.msra.mxu0 0.0
    %267 = vmatprep.subr.mxu0 0.0
    %268 = vmatpush1.msra.mxu0 0.0
    %269 = vmatprep.subr.mxu0 0.0
    %270 = vmatpush1.msra.mxu0 0.0
    %271 = vmatprep.subr.mxu0 0.0
    %272 = vmatpush1.msra.mxu0 0.0
    %273 = vmatprep.subr.mxu0 0.0
    %274 = vmatpush1.msra.mxu0 0.0
    %275 = vmatprep.subr.mxu0 0.0
    %276 = vmatpush1.msra.mxu0 0.0
    %277 = vmatprep.subr.mxu0 0.0
    %278 = vmatpush1.msra.mxu0 0.0
    %279 = vmatprep.subr.mxu0 0.0
    %280 = vmatpush1.msra.mxu0 0.0
    %281 = vmatprep.subr.mxu0 0.0
    %282 = vmatpush1.msra.mxu0 0.0
    %283 = vmatprep.subr.mxu0 %v253
    %284 = vmatpush1.msra.mxu0 %v250
    %285 = vmatprep.subr.mxu0 %v136
    %286 = vmatpush1.msra.mxu0 %v135
    %287 = vmatprep.subr.mxu0 0.0
    %288 = vmatpush2.msra.mxu0 0.0
    %289 = vmatprep.subr.mxu0 0.0
    %290 = vmatpush2.msra.mxu0 0.0
    %291 = vmatprep.subr.mxu0 0.0
    %292 = vmatpush2.msra.mxu0 0.0
    %293 = vmatprep.subr.mxu0 0.0
    %294 = vmatpush2.msra.mxu0 0.0
    %295 = vmatprep.subr.mxu0 0.0
    %296 = vmatpush2.msra.mxu0 0.0
    %297 = vmatprep.subr.mxu0 0.0
    %298 = vmatpush2.msra.mxu0 0.0
    %299 = vmatprep.subr.mxu0 0.0
    %300 = vmatpush2.msra.mxu0 0.0
    %301 = vmatprep.subr.mxu0 0.0
    %302 = vmatpush2.msra.mxu0 0.0
    %303 = vmatprep.subr.mxu0 0.0
    %304 = vmatpush2.msra.mxu0 0.0
    %305 = vmatprep.subr.mxu0 0.0
    %306 = vmatpush2.msra.mxu0 0.0
    %307 = vmatprep.subr.mxu0 0.0
    %308 = vmatpush2.msra.mxu0 0.0
    %309 = vmatprep.subr.mxu0 0.0
    %310 = vmatpush2.msra.mxu0 0.0
    %311 = vmatprep.subr.mxu0 0.0
    %312 = vmatpush2.msra.mxu0 0.0
    %313 = vmatprep.subr.mxu0 0.0
    %314 = vmatpush2.msra.mxu0 0.0
    %315 = vmatprep.subr.mxu0 0.0
    %316 = vmatpush2.msra.mxu0 0.0
    %317 = vmatprep.subr.mxu0 0.0
    %318 = vmatpush2.msra.mxu0 0.0
    %319 = vmatprep.mubr.f32.mxu0 0.0
    %320 = vmatmul.mubr.f32.gmra.mxu0 %v153
    %v321 = vpop.f32.mrf.mxu0
    %v322 = vadd.f32 %v144, %v321
    %v323 = vpop.f32.mrf.mxu0
    %v324 = vadd.f32 %v148, %v323
    %325 = vmatprep.mubr.f32.mxu0 0.0
    %326 = vmatmul.mubr.f32.gmra.mxu0 %v156
    %v327 = vpop.f32.mrf.mxu0
    %v328 = vadd.f32 %v144, %v327
    %v329 = vpop.f32.mrf.mxu0
    %v330 = vadd.f32 %v148, %v329
    %331 = vmatprep.mubr.f32.mxu0 0.0
    %332 = vmatmul.mubr.f32.gmra.mxu0 %v159
    %v333 = vpop.f32.mrf.mxu0
    %v334 = vadd.f32 %v144, %v333
    %v335 = vpop.f32.mrf.mxu0
    %v336 = vadd.f32 %v148, %v335
    %337 = vmatprep.mubr.f32.mxu0 0.0
    %338 = vmatmul.mubr.f32.gmra.mxu0 %v162
    %v339 = vpop.f32.mrf.mxu0
    %v340 = vadd.f32 %v144, %v339
    %v341 = vpop.f32.mrf.mxu0
    %v342 = vadd.f32 %v148, %v341
    %343 = vmatprep.mubr.f32.mxu0 0.0
    %344 = vmatmul.mubr.f32.gmra.mxu0 %v165
    %v345 = vpop.f32.mrf.mxu0
    %v346 = vadd.f32 %v144, %v345
    %v347 = vpop.f32.mrf.mxu0
    %v348 = vadd.f32 %v148, %v347
    %349 = vmatprep.mubr.f32.mxu0 0.0
    %350 = vmatmul.mubr.f32.gmra.mxu0 %v168
    %v351 = vpop.f32.mrf.mxu0
    %v352 = vadd.f32 %v144, %v351
    %v353 = vpop.f32.mrf.mxu0
    %v354 = vadd.f32 %v148, %v353
    %355 = vmatprep.mubr.f32.mxu0 0.0
    %356 = vmatmul.mubr.f32.gmra.mxu0 %v171
    %v357 = vpop.f32.mrf.mxu0
    %v358 = vadd.f32 %v144, %v357
    %v359 = vpop.f32.mrf.mxu0
    %v360 = vadd.f32 %v148, %v359
    %361 = vmatprep.mubr.f32.mxu0 0.0
    %362 = vmatmul.mubr.f32.gmra.mxu0 %v174
    %v363 = vpop.f32.mrf.mxu0
    %v364 = vadd.f32 %v144, %v363
    %v365 = vpop.f32.mrf.mxu0
    %v366 = vadd.f32 %v148, %v365
    %367 = vmatprep.mubr.f32.mxu0 0.0
    %368 = vmatmul.mubr.f32.gmra.mxu0 %v177
    %v369 = vpop.f32.mrf.mxu0
    %v370 = vadd.f32 %v144, %v369
    %v371 = vpop.f32.mrf.mxu0
    %v372 = vadd.f32 %v148, %v371
    %373 = vmatprep.mubr.f32.mxu0 0.0
    %374 = vmatmul.mubr.f32.gmra.mxu0 %v180
    %v375 = vpop.f32.mrf.mxu0
    %v376 = vadd.f32 %v144, %v375
    %v377 = vpop.f32.mrf.mxu0
    %v378 = vadd.f32 %v148, %v377
    %379 = vmatprep.mubr.f32.mxu0 0.0
    %380 = vmatmul.mubr.f32.gmra.mxu0 %v183
    %v381 = vpop.f32.mrf.mxu0
    %v382 = vadd.f32 %v144, %v381
    %v383 = vpop.f32.mrf.mxu0
    %v384 = vadd.f32 %v148, %v383
    %385 = vmatprep.mubr.f32.mxu0 0.0
    %386 = vmatmul.mubr.f32.gmra.mxu0 %v186
    %v387 = vpop.f32.mrf.mxu0
    %v388 = vadd.f32 %v144, %v387
    %v389 = vpop.f32.mrf.mxu0
    %v390 = vadd.f32 %v148, %v389
    %391 = vmatprep.mubr.f32.mxu0 0.0
    %392 = vmatmul.mubr.f32.gmra.mxu0 %v189
    %v393 = vpop.f32.mrf.mxu0
    %v394 = vadd.f32 %v144, %v393
    %v395 = vpop.f32.mrf.mxu0
    %v396 = vadd.f32 %v148, %v395
    %397 = vmatprep.mubr.f32.mxu0 0.0
    %398 = vmatmul.mubr.f32.gmra.mxu0 %v192
    %v399 = vpop.f32.mrf.mxu0
    %v400 = vadd.f32 %v144, %v399
    %v401 = vpop.f32.mrf.mxu0
    %v402 = vadd.f32 %v148, %v401
    %403 = vmatprep.mubr.f32.mxu0 0.0
    %404 = vmatmul.mubr.f32.gmra.mxu0 %v195
    %v405 = vpop.f32.mrf.mxu0
    %v406 = vadd.f32 %v144, %v405
    %v407 = vpop.f32.mrf.mxu0
    %v408 = vadd.f32 %v148, %v407
    %409 = vmatprep.mubr.f32.mxu0 0.0
    %410 = vmatmul.mubr.f32.gmra.mxu0 %v198
    %v411 = vpop.f32.mrf.mxu0
    %v412 = vadd.f32 %v144, %v411
    %v413 = vpop.f32.mrf.mxu0
    %v414 = vadd.f32 %v148, %v413
    %415 = vmatprep.mubr.f32.mxu0 0.0
    %416 = vmatmul.mubr.f32.gmra.mxu0 %v201
    %v417 = vpop.f32.mrf.mxu0
    %v418 = vadd.f32 %v144, %v417
    %v419 = vpop.f32.mrf.mxu0
    %v420 = vadd.f32 %v148, %v419
    %421 = vmatprep.mubr.f32.mxu0 0.0
    %422 = vmatmul.mubr.f32.gmra.mxu0 %v204
    %v423 = vpop.f32.mrf.mxu0
    %v424 = vadd.f32 %v144, %v423
    %v425 = vpop.f32.mrf.mxu0
    %v426 = vadd.f32 %v148, %v425
    %427 = vmatprep.mubr.f32.mxu0 0.0
    %428 = vmatmul.mubr.f32.gmra.mxu0 %v207
    %v429 = vpop.f32.mrf.mxu0
    %v430 = vadd.f32 %v144, %v429
    %v431 = vpop.f32.mrf.mxu0
    %v432 = vadd.f32 %v148, %v431
    %433 = vmatprep.mubr.f32.mxu0 0.0
    %434 = vmatmul.mubr.f32.gmra.mxu0 %v210
    %v435 = vpop.f32.mrf.mxu0
    %v436 = vadd.f32 %v144, %v435
    %v437 = vpop.f32.mrf.mxu0
    %v438 = vadd.f32 %v148, %v437
    %439 = vmatprep.mubr.f32.mxu0 0.0
    %440 = vmatmul.mubr.f32.gmra.mxu0 %v213
    %v441 = vpop.f32.mrf.mxu0
    %v442 = vadd.f32 %v144, %v441
    %v443 = vpop.f32.mrf.mxu0
    %v444 = vadd.f32 %v148, %v443
    %445 = vmatprep.mubr.f32.mxu0 0.0
    %446 = vmatmul.mubr.f32.gmra.mxu0 %v216
    %v447 = vpop.f32.mrf.mxu0
    %v448 = vadd.f32 %v144, %v447
    %v449 = vpop.f32.mrf.mxu0
    %v450 = vadd.f32 %v148, %v449
    %451 = vmatprep.mubr.f32.mxu0 0.0
    %452 = vmatmul.mubr.f32.gmra.mxu0 %v219
    %v453 = vpop.f32.mrf.mxu0
    %v454 = vadd.f32 %v144, %v453
    %v455 = vpop.f32.mrf.mxu0
    %v456 = vadd.f32 %v148, %v455
    %457 = vmatprep.mubr.f32.mxu0 0.0
    %458 = vmatmul.mubr.f32.gmra.mxu0 %v222
    %v459 = vpop.f32.mrf.mxu0
    %v460 = vadd.f32 %v144, %v459
    %v461 = vpop.f32.mrf.mxu0
    %v462 = vadd.f32 %v148, %v461
    %463 = vmatprep.mubr.f32.mxu0 0.0
    %464 = vmatmul.mubr.f32.gmra.mxu0 %v225
    %v465 = vpop.f32.mrf.mxu0
    %v466 = vadd.f32 %v144, %v465
    %v467 = vpop.f32.mrf.mxu0
    %v468 = vadd.f32 %v148, %v467
    %469 = vmatprep.mubr.f32.mxu0 0.0
    %470 = vmatmul.mubr.f32.gmra.mxu0 %v228
    %v471 = vpop.f32.mrf.mxu0
    %v472 = vadd.f32 %v144, %v471
    %v473 = vpop.f32.mrf.mxu0
    %v474 = vadd.f32 %v148, %v473
    %475 = vmatprep.mubr.f32.mxu0 0.0
    %476 = vmatmul.mubr.f32.gmra.mxu0 %v231
    %v477 = vpop.f32.mrf.mxu0
    %v478 = vadd.f32 %v144, %v477
    %v479 = vpop.f32.mrf.mxu0
    %v480 = vadd.f32 %v148, %v479
    %481 = vmatprep.mubr.f32.mxu0 0.0
    %482 = vmatmul.mubr.f32.gmra.mxu0 %v234
    %v483 = vpop.f32.mrf.mxu0
    %v484 = vadd.f32 %v144, %v483
    %v485 = vpop.f32.mrf.mxu0
    %v486 = vadd.f32 %v148, %v485
    %487 = vmatprep.mubr.f32.mxu0 0.0
    %488 = vmatmul.mubr.f32.gmra.mxu0 %v237
    %v489 = vpop.f32.mrf.mxu0
    %v490 = vadd.f32 %v144, %v489
    %v491 = vpop.f32.mrf.mxu0
    %v492 = vadd.f32 %v148, %v491
    %493 = vmatprep.mubr.f32.mxu0 0.0
    %494 = vmatmul.mubr.f32.gmra.mxu0 %v240
    %v495 = vpop.f32.mrf.mxu0
    %v496 = vadd.f32 %v144, %v495
    %v497 = vpop.f32.mrf.mxu0
    %v498 = vadd.f32 %v148, %v497
    %499 = vmatprep.mubr.f32.mxu0 0.0
    %500 = vmatmul.mubr.f32.gmra.mxu0 %v243
    %v501 = vpop.f32.mrf.mxu0
    %v502 = vadd.f32 %v144, %v501
    %v503 = vpop.f32.mrf.mxu0
    %v504 = vadd.f32 %v148, %v503
    %505 = vmatprep.mubr.f32.mxu0 0.0
    %506 = vmatmul.mubr.f32.gmra.mxu0 %v246
    %v507 = vpop.f32.mrf.mxu0
    %v508 = vadd.f32 %v144, %v507
    %v509 = vpop.f32.mrf.mxu0
    %v510 = vadd.f32 %v148, %v509
    %511 = vdwg.mxu0
    %vm512 = vcmp.gt.f32.partialorder %v322, 0.0
    %vm513 = vcmp.gt.f32.partialorder %v324, 0.0
    %vm514 = vcmp.gt.f32.partialorder %v328, 0.0
    %vm515 = vcmp.gt.f32.partialorder %v330, 0.0
    %vm516 = vcmp.gt.f32.partialorder %v334, 0.0
    %vm517 = vcmp.gt.f32.partialorder %v336, 0.0
    %vm518 = vcmp.gt.f32.partialorder %v340, 0.0
    %vm519 = vcmp.gt.f32.partialorder %v342, 0.0
    %vm520 = vcmp.gt.f32.partialorder %v346, 0.0
    %vm521 = vcmp.gt.f32.partialorder %v348, 0.0
    %vm522 = vcmp.gt.f32.partialorder %v352, 0.0
    %vm523 = vcmp.gt.f32.partialorder %v354, 0.0
    %vm524 = vcmp.gt.f32.partialorder %v358, 0.0
    %vm525 = vcmp.gt.f32.partialorder %v360, 0.0
    %vm526 = vcmp.gt.f32.partialorder %v364, 0.0
    %vm527 = vcmp.gt.f32.partialorder %v366, 0.0
    %vm528 = vcmp.gt.f32.partialorder %v370, 0.0
    %vm529 = vcmp.gt.f32.partialorder %v372, 0.0
    %vm530 = vcmp.gt.f32.partialorder %v376, 0.0
    %vm531 = vcmp.gt.f32.partialorder %v378, 0.0
    %vm532 = vcmp.gt.f32.partialorder %v382, 0.0
    %vm533 = vcmp.gt.f32.partialorder %v384, 0.0
    %vm534 = vcmp.gt.f32.partialorder %v388, 0.0
    %vm535 = vcmp.gt.f32.partialorder %v390, 0.0
    %vm536 = vcmp.gt.f32.partialorder %v394, 0.0
    %vm537 = vcmp.gt.f32.partialorder %v396, 0.0
    %vm538 = vcmp.gt.f32.partialorder %v400, 0.0
    %vm539 = vcmp.gt.f32.partialorder %v402, 0.0
    %vm540 = vcmp.gt.f32.partialorder %v406, 0.0
    %vm541 = vcmp.gt.f32.partialorder %v408, 0.0
    %vm542 = vcmp.gt.f32.partialorder %v412, 0.0
    %vm543 = vcmp.gt.f32.partialorder %v414, 0.0
    %vm544 = vcmp.gt.f32.partialorder %v418, 0.0
    %vm545 = vcmp.gt.f32.partialorder %v420, 0.0
    %vm546 = vcmp.gt.f32.partialorder %v424, 0.0
    %vm547 = vcmp.gt.f32.partialorder %v426, 0.0
    %vm548 = vcmp.gt.f32.partialorder %v430, 0.0
    %vm549 = vcmp.gt.f32.partialorder %v432, 0.0
    %vm550 = vcmp.gt.f32.partialorder %v436, 0.0
    %vm551 = vcmp.gt.f32.partialorder %v438, 0.0
    %vm552 = vcmp.gt.f32.partialorder %v442, 0.0
    %vm553 = vcmp.gt.f32.partialorder %v444, 0.0
    %vm554 = vcmp.gt.f32.partialorder %v448, 0.0
    %vm555 = vcmp.gt.f32.partialorder %v450, 0.0
    %vm556 = vcmp.gt.f32.partialorder %v454, 0.0
    %vm557 = vcmp.gt.f32.partialorder %v456, 0.0
    %vm558 = vcmp.gt.f32.partialorder %v460, 0.0
    %vm559 = vcmp.gt.f32.partialorder %v462, 0.0
    %vm560 = vcmp.gt.f32.partialorder %v466, 0.0
    %vm561 = vcmp.gt.f32.partialorder %v468, 0.0
    %vm562 = vcmp.gt.f32.partialorder %v472, 0.0
    %vm563 = vcmp.gt.f32.partialorder %v474, 0.0
    %vm564 = vcmp.gt.f32.partialorder %v478, 0.0
    %vm565 = vcmp.gt.f32.partialorder %v480, 0.0
    %vm566 = vcmp.gt.f32.partialorder %v484, 0.0
    %vm567 = vcmp.gt.f32.partialorder %v486, 0.0
    %vm568 = vcmp.gt.f32.partialorder %v490, 0.0
    %vm569 = vcmp.gt.f32.partialorder %v492, 0.0
    %vm570 = vcmp.gt.f32.partialorder %v496, 0.0
    %vm571 = vcmp.gt.f32.partialorder %v498, 0.0
    %vm572 = vcmp.gt.f32.partialorder %v502, 0.0
    %vm573 = vcmp.gt.f32.partialorder %v504, 0.0
    %vm574 = vcmp.gt.f32.partialorder %v508, 0.0
    %vm575 = vcmp.gt.f32.partialorder %v510, 0.0
    %v576 = vmul.f32 %v322, 0.2
    %v577 = vmul.f32 %v324, 0.2
    %v578 = vmul.f32 %v328, 0.2
    %v579 = vmul.f32 %v330, 0.2
    %v580 = vmul.f32 %v334, 0.2
    %v581 = vmul.f32 %v336, 0.2
    %v582 = vmul.f32 %v340, 0.2
    %v583 = vmul.f32 %v342, 0.2
    %v584 = vmul.f32 %v346, 0.2
    %v585 = vmul.f32 %v348, 0.2
    %v586 = vmul.f32 %v352, 0.2
    %v587 = vmul.f32 %v354, 0.2
    %v588 = vmul.f32 %v358, 0.2
    %v589 = vmul.f32 %v360, 0.2
    %v590 = vmul.f32 %v364, 0.2
    %v591 = vmul.f32 %v366, 0.2
    %v592 = vmul.f32 %v370, 0.2
    %v593 = vmul.f32 %v372, 0.2
    %v594 = vmul.f32 %v376, 0.2
    %v595 = vmul.f32 %v378, 0.2
    %v596 = vmul.f32 %v382, 0.2
    %v597 = vmul.f32 %v384, 0.2
    %v598 = vmul.f32 %v388, 0.2
    %v599 = vmul.f32 %v390, 0.2
    %v600 = vmul.f32 %v394, 0.2
    %v601 = vmul.f32 %v396, 0.2
    %v602 = vmul.f32 %v400, 0.2
    %v603 = vmul.f32 %v402, 0.2
    %v604 = vmul.f32 %v406, 0.2
    %v605 = vmul.f32 %v408, 0.2
    %v606 = vmul.f32 %v412, 0.2
    %v607 = vmul.f32 %v414, 0.2
    %v608 = vmul.f32 %v418, 0.2
    %v609 = vmul.f32 %v420, 0.2
    %v610 = vmul.f32 %v424, 0.2
    %v611 = vmul.f32 %v426, 0.2
    %v612 = vmul.f32 %v430, 0.2
    %v613 = vmul.f32 %v432, 0.2
    %v614 = vmul.f32 %v436, 0.2
    %v615 = vmul.f32 %v438, 0.2
    %v616 = vmul.f32 %v442, 0.2
    %v617 = vmul.f32 %v444, 0.2
    %v618 = vmul.f32 %v448, 0.2
    %v619 = vmul.f32 %v450, 0.2
    %v620 = vmul.f32 %v454, 0.2
    %v621 = vmul.f32 %v456, 0.2
    %v622 = vmul.f32 %v460, 0.2
    %v623 = vmul.f32 %v462, 0.2
    %v624 = vmul.f32 %v466, 0.2
    %v625 = vmul.f32 %v468, 0.2
    %v626 = vmul.f32 %v472, 0.2
    %v627 = vmul.f32 %v474, 0.2
    %v628 = vmul.f32 %v478, 0.2
    %v629 = vmul.f32 %v480, 0.2
    %v630 = vmul.f32 %v484, 0.2
    %v631 = vmul.f32 %v486, 0.2
    %v632 = vmul.f32 %v490, 0.2
    %v633 = vmul.f32 %v492, 0.2
    %v634 = vmul.f32 %v496, 0.2
    %v635 = vmul.f32 %v498, 0.2
    %v636 = vmul.f32 %v502, 0.2
    %v637 = vmul.f32 %v504, 0.2
    %v638 = vmul.f32 %v508, 0.2
    %v639 = vmul.f32 %v510, 0.2
    %v640 = vsel %vm512, %v322, %v576
    %v641 = vsel %vm513, %v324, %v577
    %v642 = vsel %vm514, %v328, %v578
    %v643 = vsel %vm515, %v330, %v579
    %v644 = vsel %vm516, %v334, %v580
    %v645 = vsel %vm517, %v336, %v581
    %v646 = vsel %vm518, %v340, %v582
    %v647 = vsel %vm519, %v342, %v583
    %v648 = vsel %vm520, %v346, %v584
    %v649 = vsel %vm521, %v348, %v585
    %v650 = vsel %vm522, %v352, %v586
    %v651 = vsel %vm523, %v354, %v587
    %v652 = vsel %vm524, %v358, %v588
    %v653 = vsel %vm525, %v360, %v589
    %v654 = vsel %vm526, %v364, %v590
    %v655 = vsel %vm527, %v366, %v591
    %v656 = vsel %vm528, %v370, %v592
    %v657 = vsel %vm529, %v372, %v593
    %v658 = vsel %vm530, %v376, %v594
    %v659 = vsel %vm531, %v378, %v595
    %v660 = vsel %vm532, %v382, %v596
    %v661 = vsel %vm533, %v384, %v597
    %v662 = vsel %vm534, %v388, %v598
    %v663 = vsel %vm535, %v390, %v599
    %v664 = vsel %vm536, %v394, %v600
    %v665 = vsel %vm537, %v396, %v601
    %v666 = vsel %vm538, %v400, %v602
    %v667 = vsel %vm539, %v402, %v603
    %v668 = vsel %vm540, %v406, %v604
    %v669 = vsel %vm541, %v408, %v605
    %v670 = vsel %vm542, %v412, %v606
    %v671 = vsel %vm543, %v414, %v607
    %v672 = vsel %vm544, %v418, %v608
    %v673 = vsel %vm545, %v420, %v609
    %v674 = vsel %vm546, %v424, %v610
    %v675 = vsel %vm547, %v426, %v611
    %v676 = vsel %vm548, %v430, %v612
    %v677 = vsel %vm549, %v432, %v613
    %v678 = vsel %vm550, %v436, %v614
    %v679 = vsel %vm551, %v438, %v615
    %v680 = vsel %vm552, %v442, %v616
    %v681 = vsel %vm553, %v444, %v617
    %v682 = vsel %vm554, %v448, %v618
    %v683 = vsel %vm555, %v450, %v619
    %v684 = vsel %vm556, %v454, %v620
    %v685 = vsel %vm557, %v456, %v621
    %v686 = vsel %vm558, %v460, %v622
    %v687 = vsel %vm559, %v462, %v623
    %v688 = vsel %vm560, %v466, %v624
    %v689 = vsel %vm561, %v468, %v625
    %v690 = vsel %vm562, %v472, %v626
    %v691 = vsel %vm563, %v474, %v627
    %v692 = vsel %vm564, %v478, %v628
    %v693 = vsel %vm565, %v480, %v629
    %v694 = vsel %vm566, %v484, %v630
    %v695 = vsel %vm567, %v486, %v631
    %v696 = vsel %vm568, %v490, %v632
    %v697 = vsel %vm569, %v492, %v633
    %v698 = vsel %vm570, %v496, %v634
    %v699 = vsel %vm571, %v498, %v635
    %v700 = vsel %vm572, %v502, %v636
    %v701 = vsel %vm573, %v504, %v637
    %v702 = vsel %vm574, %v508, %v638
    %v703 = vsel %vm575, %v510, %v639
    %v704 = vld [vmem:[#allocation2] sm:$0xff]
    %v705 = vld [vmem:[#allocation2 + $0x8] sm:$0xff]
    %v706 = vld [vmem:[#allocation2 + $0x10] sm:$0xff]
    %v707 = vld [vmem:[#allocation2 + $0x18] sm:$0xff]
    %v708 = vld [vmem:[#allocation2 + $0x20] sm:$0xff]
    %v709 = vld [vmem:[#allocation2 + $0x28] sm:$0xff]
    %v710 = vld [vmem:[#allocation2 + $0x30] sm:$0xff]
    %v711 = vld [vmem:[#allocation2 + $0x38] sm:$0xff]
    %v712 = vld [vmem:[#allocation2 + $0x40] sm:$0xff]
    %v713 = vld [vmem:[#allocation2 + $0x48] sm:$0xff]
    %v714 = vld [vmem:[#allocation2 + $0x50] sm:$0xff]
    %v715 = vld [vmem:[#allocation2 + $0x58] sm:$0xff]
    %v716 = vld [vmem:[#allocation2 + $0x60] sm:$0xff]
    %v717 = vld [vmem:[#allocation2 + $0x68] sm:$0xff]
    %v718 = vld [vmem:[#allocation2 + $0x70] sm:$0xff]
    %v719 = vld [vmem:[#allocation2 + $0x78] sm:$0xff]
    %v720 = vld [vmem:[#allocation2 + $0x80] sm:$0xff]
    %v721 = vld [vmem:[#allocation2 + $0x88] sm:$0xff]
    %v722 = vld [vmem:[#allocation2 + $0x90] sm:$0xff]
    %v723 = vld [vmem:[#allocation2 + $0x98] sm:$0xff]
    %v724 = vld [vmem:[#allocation2 + $0xa0] sm:$0xff]
    %v725 = vld [vmem:[#allocation2 + $0xa8] sm:$0xff]
    %v726 = vld [vmem:[#allocation2 + $0xb0] sm:$0xff]
    %v727 = vld [vmem:[#allocation2 + $0xb8] sm:$0xff]
    %v728 = vld [vmem:[#allocation2 + $0xc0] sm:$0xff]
    %v729 = vld [vmem:[#allocation2 + $0xc8] sm:$0xff]
    %v730 = vld [vmem:[#allocation2 + $0xd0] sm:$0xff]
    %v731 = vld [vmem:[#allocation2 + $0xd8] sm:$0xff]
    %v732 = vld [vmem:[#allocation2 + $0xe0] sm:$0xff]
    %v733 = vld [vmem:[#allocation2 + $0xe8] sm:$0xff]
    %v734 = vld [vmem:[#allocation2 + $0xf0] sm:$0xff]
    %v735 = vld [vmem:[#allocation2 + $0xf8] sm:$0xff]
    %v736 = vld [vmem:[#allocation2 + $0x100] sm:$0xff]
    %v737 = vld [vmem:[#allocation2 + $0x108] sm:$0xff]
    %v738 = vld [vmem:[#allocation2 + $0x110] sm:$0xff]
    %v739 = vld [vmem:[#allocation2 + $0x118] sm:$0xff]
    %v740 = vld [vmem:[#allocation2 + $0x120] sm:$0xff]
    %v741 = vld [vmem:[#allocation2 + $0x128] sm:$0xff]
    %v742 = vld [vmem:[#allocation2 + $0x130] sm:$0xff]
    %v743 = vld [vmem:[#allocation2 + $0x138] sm:$0xff]
    %v744 = vld [vmem:[#allocation2 + $0x140] sm:$0xff]
    %v745 = vld [vmem:[#allocation2 + $0x148] sm:$0xff]
    %v746 = vld [vmem:[#allocation2 + $0x150] sm:$0xff]
    %v747 = vld [vmem:[#allocation2 + $0x158] sm:$0xff]
    %v748 = vld [vmem:[#allocation2 + $0x160] sm:$0xff]
    %v749 = vld [vmem:[#allocation2 + $0x168] sm:$0xff]
    %v750 = vld [vmem:[#allocation2 + $0x170] sm:$0xff]
    %v751 = vld [vmem:[#allocation2 + $0x178] sm:$0xff]
    %v752 = vld [vmem:[#allocation2 + $0x180] sm:$0xff]
    %v753 = vld [vmem:[#allocation2 + $0x188] sm:$0xff]
    %v754 = vld [vmem:[#allocation2 + $0x190] sm:$0xff]
    %v755 = vld [vmem:[#allocation2 + $0x198] sm:$0xff]
    %v756 = vld [vmem:[#allocation2 + $0x1a0] sm:$0xff]
    %v757 = vld [vmem:[#allocation2 + $0x1a8] sm:$0xff]
    %v758 = vld [vmem:[#allocation2 + $0x1b0] sm:$0xff]
    %v759 = vld [vmem:[#allocation2 + $0x1b8] sm:$0xff]
    %v760 = vld [vmem:[#allocation2 + $0x1c0] sm:$0xff]
    %v761 = vld [vmem:[#allocation2 + $0x1c8] sm:$0xff]
    %v762 = vld [vmem:[#allocation2 + $0x1d0] sm:$0xff]
    %v763 = vld [vmem:[#allocation2 + $0x1d8] sm:$0xff]
    %v764 = vld [vmem:[#allocation2 + $0x1e0] sm:$0xff]
    %v765 = vld [vmem:[#allocation2 + $0x1e8] sm:$0xff]
    %v766 = vld [vmem:[#allocation2 + $0x1f0] sm:$0xff]
    %v767 = vld [vmem:[#allocation2 + $0x1f8] sm:$0xff]
    %v768 = vld [vmem:[%s5] sm:$0x3]
    %v770 = vlaneseq
    %v771 = vshrl.u32 %v770, 7
    %v772 = vsub.s32 0, %v771
    %v773 = vrot.slane %v768, %v772
    %v774 = vlaneseq
    %v775 = vshrl.u32 %v774, 7
    %v776 = vsub.s32 1, %v775
    %v777 = vrot.slane %v768, %v776
    %780 = vmatprep.subr.mxu0 %v735
    %781 = vmatpush1.msra.mxu0 %v734
    %782 = vmatprep.subr.mxu0 %v733
    %783 = vmatpush1.msra.mxu0 %v732
    %784 = vmatprep.subr.mxu0 %v731
    %785 = vmatpush1.msra.mxu0 %v730
    %786 = vmatprep.subr.mxu0 %v729
    %787 = vmatpush1.msra.mxu0 %v728
    %788 = vmatprep.subr.mxu0 %v727
    %789 = vmatpush1.msra.mxu0 %v726
    %790 = vmatprep.subr.mxu0 %v725
    %791 = vmatpush1.msra.mxu0 %v724
    %792 = vmatprep.subr.mxu0 %v723
    %793 = vmatpush1.msra.mxu0 %v722
    %794 = vmatprep.subr.mxu0 %v721
    %795 = vmatpush1.msra.mxu0 %v720
    %796 = vmatprep.subr.mxu0 %v719
    %797 = vmatpush1.msra.mxu0 %v718
    %798 = vmatprep.subr.mxu0 %v717
    %799 = vmatpush1.msra.mxu0 %v716
    %800 = vmatprep.subr.mxu0 %v715
    %801 = vmatpush1.msra.mxu0 %v714
    %802 = vmatprep.subr.mxu0 %v713
    %803 = vmatpush1.msra.mxu0 %v712
    %804 = vmatprep.subr.mxu0 %v711
    %805 = vmatpush1.msra.mxu0 %v710
    %806 = vmatprep.subr.mxu0 %v709
    %807 = vmatpush1.msra.mxu0 %v708
    %808 = vmatprep.subr.mxu0 %v707
    %809 = vmatpush1.msra.mxu0 %v706
    %810 = vmatprep.subr.mxu0 %v705
    %811 = vmatpush1.msra.mxu0 %v704
    %812 = vmatprep.subr.mxu0 %v767
    %813 = vmatpush2.msra.mxu0 %v766
    %814 = vmatprep.subr.mxu0 %v765
    %815 = vmatpush2.msra.mxu0 %v764
    %816 = vmatprep.subr.mxu0 %v763
    %817 = vmatpush2.msra.mxu0 %v762
    %818 = vmatprep.subr.mxu0 %v761
    %819 = vmatpush2.msra.mxu0 %v760
    %820 = vmatprep.subr.mxu0 %v759
    %821 = vmatpush2.msra.mxu0 %v758
    %822 = vmatprep.subr.mxu0 %v757
    %823 = vmatpush2.msra.mxu0 %v756
    %824 = vmatprep.subr.mxu0 %v755
    %825 = vmatpush2.msra.mxu0 %v754
    %826 = vmatprep.subr.mxu0 %v753
    %827 = vmatpush2.msra.mxu0 %v752
    %828 = vmatprep.subr.mxu0 %v751
    %829 = vmatpush2.msra.mxu0 %v750
    %830 = vmatprep.subr.mxu0 %v749
    %831 = vmatpush2.msra.mxu0 %v748
    %832 = vmatprep.subr.mxu0 %v747
    %833 = vmatpush2.msra.mxu0 %v746
    %834 = vmatprep.subr.mxu0 %v745
    %835 = vmatpush2.msra.mxu0 %v744
    %836 = vmatprep.subr.mxu0 %v743
    %837 = vmatpush2.msra.mxu0 %v742
    %838 = vmatprep.subr.mxu0 %v741
    %839 = vmatpush2.msra.mxu0 %v740
    %840 = vmatprep.subr.mxu0 %v739
    %841 = vmatpush2.msra.mxu0 %v738
    %842 = vmatprep.subr.mxu0 %v737
    %843 = vmatpush2.msra.mxu0 %v736
    %844 = vmatprep.mubr.f32.mxu0 %v641
    %845 = vmatmul.mubr.f32.gmra.mxu0 %v640
    %v846 = vpop.f32.mrf.mxu0
    %v847 = vadd.f32 %v773, %v846
    %v848 = vpop.f32.mrf.mxu0
    %v849 = vadd.f32 %v777, %v848
    %850 = vmatprep.mubr.f32.mxu0 %v643
    %851 = vmatmul.mubr.f32.gmra.mxu0 %v642
    %v852 = vpop.f32.mrf.mxu0
    %v853 = vadd.f32 %v773, %v852
    %v854 = vpop.f32.mrf.mxu0
    %v855 = vadd.f32 %v777, %v854
    %856 = vmatprep.mubr.f32.mxu0 %v645
    %857 = vmatmul.mubr.f32.gmra.mxu0 %v644
    %v858 = vpop.f32.mrf.mxu0
    %v859 = vadd.f32 %v773, %v858
    %v860 = vpop.f32.mrf.mxu0
    %v861 = vadd.f32 %v777, %v860
    %862 = vmatprep.mubr.f32.mxu0 %v647
    %863 = vmatmul.mubr.f32.gmra.mxu0 %v646
    %v864 = vpop.f32.mrf.mxu0
    %v865 = vadd.f32 %v773, %v864
    %v866 = vpop.f32.mrf.mxu0
    %v867 = vadd.f32 %v777, %v866
    %868 = vmatprep.mubr.f32.mxu0 %v649
    %869 = vmatmul.mubr.f32.gmra.mxu0 %v648
    %v870 = vpop.f32.mrf.mxu0
    %v871 = vadd.f32 %v773, %v870
    %v872 = vpop.f32.mrf.mxu0
    %v873 = vadd.f32 %v777, %v872
    %874 = vmatprep.mubr.f32.mxu0 %v651
    %875 = vmatmul.mubr.f32.gmra.mxu0 %v650
    %v876 = vpop.f32.mrf.mxu0
    %v877 = vadd.f32 %v773, %v876
    %v878 = vpop.f32.mrf.mxu0
    %v879 = vadd.f32 %v777, %v878
    %880 = vmatprep.mubr.f32.mxu0 %v653
    %881 = vmatmul.mubr.f32.gmra.mxu0 %v652
    %v882 = vpop.f32.mrf.mxu0
    %v883 = vadd.f32 %v773, %v882
    %v884 = vpop.f32.mrf.mxu0
    %v885 = vadd.f32 %v777, %v884
    %886 = vmatprep.mubr.f32.mxu0 %v655
    %887 = vmatmul.mubr.f32.gmra.mxu0 %v654
    %v888 = vpop.f32.mrf.mxu0
    %v889 = vadd.f32 %v773, %v888
    %v890 = vpop.f32.mrf.mxu0
    %v891 = vadd.f32 %v777, %v890
    %892 = vmatprep.mubr.f32.mxu0 %v657
    %893 = vmatmul.mubr.f32.gmra.mxu0 %v656
    %v894 = vpop.f32.mrf.mxu0
    %v895 = vadd.f32 %v773, %v894
    %v896 = vpop.f32.mrf.mxu0
    %v897 = vadd.f32 %v777, %v896
    %898 = vmatprep.mubr.f32.mxu0 %v659
    %899 = vmatmul.mubr.f32.gmra.mxu0 %v658
    %v900 = vpop.f32.mrf.mxu0
    %v901 = vadd.f32 %v773, %v900
    %v902 = vpop.f32.mrf.mxu0
    %v903 = vadd.f32 %v777, %v902
    %904 = vmatprep.mubr.f32.mxu0 %v661
    %905 = vmatmul.mubr.f32.gmra.mxu0 %v660
    %v906 = vpop.f32.mrf.mxu0
    %v907 = vadd.f32 %v773, %v906
    %v908 = vpop.f32.mrf.mxu0
    %v909 = vadd.f32 %v777, %v908
    %910 = vmatprep.mubr.f32.mxu0 %v663
    %911 = vmatmul.mubr.f32.gmra.mxu0 %v662
    %v912 = vpop.f32.mrf.mxu0
    %v913 = vadd.f32 %v773, %v912
    %v914 = vpop.f32.mrf.mxu0
    %v915 = vadd.f32 %v777, %v914
    %916 = vmatprep.mubr.f32.mxu0 %v665
    %917 = vmatmul.mubr.f32.gmra.mxu0 %v664
    %v918 = vpop.f32.mrf.mxu0
    %v919 = vadd.f32 %v773, %v918
    %v920 = vpop.f32.mrf.mxu0
    %v921 = vadd.f32 %v777, %v920
    %922 = vmatprep.mubr.f32.mxu0 %v667
    %923 = vmatmul.mubr.f32.gmra.mxu0 %v666
    %v924 = vpop.f32.mrf.mxu0
    %v925 = vadd.f32 %v773, %v924
    %v926 = vpop.f32.mrf.mxu0
    %v927 = vadd.f32 %v777, %v926
    %928 = vmatprep.mubr.f32.mxu0 %v669
    %929 = vmatmul.mubr.f32.gmra.mxu0 %v668
    %v930 = vpop.f32.mrf.mxu0
    %v931 = vadd.f32 %v773, %v930
    %v932 = vpop.f32.mrf.mxu0
    %v933 = vadd.f32 %v777, %v932
    %934 = vmatprep.mubr.f32.mxu0 %v671
    %935 = vmatmul.mubr.f32.gmra.mxu0 %v670
    %v936 = vpop.f32.mrf.mxu0
    %v937 = vadd.f32 %v773, %v936
    %v938 = vpop.f32.mrf.mxu0
    %v939 = vadd.f32 %v777, %v938
    %940 = vmatprep.mubr.f32.mxu0 %v673
    %941 = vmatmul.mubr.f32.gmra.mxu0 %v672
    %v942 = vpop.f32.mrf.mxu0
    %v943 = vadd.f32 %v773, %v942
    %v944 = vpop.f32.mrf.mxu0
    %v945 = vadd.f32 %v777, %v944
    %946 = vmatprep.mubr.f32.mxu0 %v675
    %947 = vmatmul.mubr.f32.gmra.mxu0 %v674
    %v948 = vpop.f32.mrf.mxu0
    %v949 = vadd.f32 %v773, %v948
    %v950 = vpop.f32.mrf.mxu0
    %v951 = vadd.f32 %v777, %v950
    %952 = vmatprep.mubr.f32.mxu0 %v677
    %953 = vmatmul.mubr.f32.gmra.mxu0 %v676
    %v954 = vpop.f32.mrf.mxu0
    %v955 = vadd.f32 %v773, %v954
    %v956 = vpop.f32.mrf.mxu0
    %v957 = vadd.f32 %v777, %v956
    %958 = vmatprep.mubr.f32.mxu0 %v679
    %959 = vmatmul.mubr.f32.gmra.mxu0 %v678
    %v960 = vpop.f32.mrf.mxu0
    %v961 = vadd.f32 %v773, %v960
    %v962 = vpop.f32.mrf.mxu0
    %v963 = vadd.f32 %v777, %v962
    %964 = vmatprep.mubr.f32.mxu0 %v681
    %965 = vmatmul.mubr.f32.gmra.mxu0 %v680
    %v966 = vpop.f32.mrf.mxu0
    %v967 = vadd.f32 %v773, %v966
    %v968 = vpop.f32.mrf.mxu0
    %v969 = vadd.f32 %v777, %v968
    %970 = vmatprep.mubr.f32.mxu0 %v683
    %971 = vmatmul.mubr.f32.gmra.mxu0 %v682
    %v972 = vpop.f32.mrf.mxu0
    %v973 = vadd.f32 %v773, %v972
    %v974 = vpop.f32.mrf.mxu0
    %v975 = vadd.f32 %v777, %v974
    %976 = vmatprep.mubr.f32.mxu0 %v685
    %977 = vmatmul.mubr.f32.gmra.mxu0 %v684
    %v978 = vpop.f32.mrf.mxu0
    %v979 = vadd.f32 %v773, %v978
    %v980 = vpop.f32.mrf.mxu0
    %v981 = vadd.f32 %v777, %v980
    %982 = vmatprep.mubr.f32.mxu0 %v687
    %983 = vmatmul.mubr.f32.gmra.mxu0 %v686
    %v984 = vpop.f32.mrf.mxu0
    %v985 = vadd.f32 %v773, %v984
    %v986 = vpop.f32.mrf.mxu0
    %v987 = vadd.f32 %v777, %v986
    %988 = vmatprep.mubr.f32.mxu0 %v689
    %989 = vmatmul.mubr.f32.gmra.mxu0 %v688
    %v990 = vpop.f32.mrf.mxu0
    %v991 = vadd.f32 %v773, %v990
    %v992 = vpop.f32.mrf.mxu0
    %v993 = vadd.f32 %v777, %v992
    %994 = vmatprep.mubr.f32.mxu0 %v691
    %995 = vmatmul.mubr.f32.gmra.mxu0 %v690
    %v996 = vpop.f32.mrf.mxu0
    %v997 = vadd.f32 %v773, %v996
    %v998 = vpop.f32.mrf.mxu0
    %v999 = vadd.f32 %v777, %v998
    %1000 = vmatprep.mubr.f32.mxu0 %v693
    %1001 = vmatmul.mubr.f32.gmra.mxu0 %v692
    %v1002 = vpop.f32.mrf.mxu0
    %v1003 = vadd.f32 %v773, %v1002
    %v1004 = vpop.f32.mrf.mxu0
    %v1005 = vadd.f32 %v777, %v1004
    %1006 = vmatprep.mubr.f32.mxu0 %v695
    %1007 = vmatmul.mubr.f32.gmra.mxu0 %v694
    %v1008 = vpop.f32.mrf.mxu0
    %v1009 = vadd.f32 %v773, %v1008
    %v1010 = vpop.f32.mrf.mxu0
    %v1011 = vadd.f32 %v777, %v1010
    %1012 = vmatprep.mubr.f32.mxu0 %v697
    %1013 = vmatmul.mubr.f32.gmra.mxu0 %v696
    %v1014 = vpop.f32.mrf.mxu0
    %v1015 = vadd.f32 %v773, %v1014
    %v1016 = vpop.f32.mrf.mxu0
    %v1017 = vadd.f32 %v777, %v1016
    %1018 = vmatprep.mubr.f32.mxu0 %v699
    %1019 = vmatmul.mubr.f32.gmra.mxu0 %v698
    %v1020 = vpop.f32.mrf.mxu0
    %v1021 = vadd.f32 %v773, %v1020
    %v1022 = vpop.f32.mrf.mxu0
    %v1023 = vadd.f32 %v777, %v1022
    %1024 = vmatprep.mubr.f32.mxu0 %v701
    %1025 = vmatmul.mubr.f32.gmra.mxu0 %v700
    %v1026 = vpop.f32.mrf.mxu0
    %v1027 = vadd.f32 %v773, %v1026
    %v1028 = vpop.f32.mrf.mxu0
    %v1029 = vadd.f32 %v777, %v1028
    %1030 = vmatprep.mubr.f32.mxu0 %v703
    %1031 = vmatmul.mubr.f32.gmra.mxu0 %v702
    %v1032 = vpop.f32.mrf.mxu0
    %v1033 = vadd.f32 %v773, %v1032
    %v1034 = vpop.f32.mrf.mxu0
    %v1035 = vadd.f32 %v777, %v1034
    %1036 = vdwg.mxu0
    %vm1037 = vcmp.gt.f32.partialorder %v847, 0.0
    %vm1038 = vcmp.gt.f32.partialorder %v849, 0.0
    %vm1039 = vcmp.gt.f32.partialorder %v853, 0.0
    %vm1040 = vcmp.gt.f32.partialorder %v855, 0.0
    %vm1041 = vcmp.gt.f32.partialorder %v859, 0.0
    %vm1042 = vcmp.gt.f32.partialorder %v861, 0.0
    %vm1043 = vcmp.gt.f32.partialorder %v865, 0.0
    %vm1044 = vcmp.gt.f32.partialorder %v867, 0.0
    %vm1045 = vcmp.gt.f32.partialorder %v871, 0.0
    %vm1046 = vcmp.gt.f32.partialorder %v873, 0.0
    %vm1047 = vcmp.gt.f32.partialorder %v877, 0.0
    %vm1048 = vcmp.gt.f32.partialorder %v879, 0.0
    %vm1049 = vcmp.gt.f32.partialorder %v883, 0.0
    %vm1050 = vcmp.gt.f32.partialorder %v885, 0.0
    %vm1051 = vcmp.gt.f32.partialorder %v889, 0.0
    %vm1052 = vcmp.gt.f32.partialorder %v891, 0.0
    %vm1053 = vcmp.gt.f32.partialorder %v895, 0.0
    %vm1054 = vcmp.gt.f32.partialorder %v897, 0.0
    %vm1055 = vcmp.gt.f32.partialorder %v901, 0.0
    %vm1056 = vcmp.gt.f32.partialorder %v903, 0.0
    %vm1057 = vcmp.gt.f32.partialorder %v907, 0.0
    %vm1058 = vcmp.gt.f32.partialorder %v909, 0.0
    %vm1059 = vcmp.gt.f32.partialorder %v913, 0.0
    %vm1060 = vcmp.gt.f32.partialorder %v915, 0.0
    %vm1061 = vcmp.gt.f32.partialorder %v919, 0.0
    %vm1062 = vcmp.gt.f32.partialorder %v921, 0.0
    %vm1063 = vcmp.gt.f32.partialorder %v925, 0.0
    %vm1064 = vcmp.gt.f32.partialorder %v927, 0.0
    %vm1065 = vcmp.gt.f32.partialorder %v931, 0.0
    %vm1066 = vcmp.gt.f32.partialorder %v933, 0.0
    %vm1067 = vcmp.gt.f32.partialorder %v937, 0.0
    %vm1068 = vcmp.gt.f32.partialorder %v939, 0.0
    %vm1069 = vcmp.gt.f32.partialorder %v943, 0.0
    %vm1070 = vcmp.gt.f32.partialorder %v945, 0.0
    %vm1071 = vcmp.gt.f32.partialorder %v949, 0.0
    %vm1072 = vcmp.gt.f32.partialorder %v951, 0.0
    %vm1073 = vcmp.gt.f32.partialorder %v955, 0.0
    %vm1074 = vcmp.gt.f32.partialorder %v957, 0.0
    %vm1075 = vcmp.gt.f32.partialorder %v961, 0.0
    %vm1076 = vcmp.gt.f32.partialorder %v963, 0.0
    %vm1077 = vcmp.gt.f32.partialorder %v967, 0.0
    %vm1078 = vcmp.gt.f32.partialorder %v969, 0.0
    %vm1079 = vcmp.gt.f32.partialorder %v973, 0.0
    %vm1080 = vcmp.gt.f32.partialorder %v975, 0.0
    %vm1081 = vcmp.gt.f32.partialorder %v979, 0.0
    %vm1082 = vcmp.gt.f32.partialorder %v981, 0.0
    %vm1083 = vcmp.gt.f32.partialorder %v985, 0.0
    %vm1084 = vcmp.gt.f32.partialorder %v987, 0.0
    %vm1085 = vcmp.gt.f32.partialorder %v991, 0.0
    %vm1086 = vcmp.gt.f32.partialorder %v993, 0.0
    %vm1087 = vcmp.gt.f32.partialorder %v997, 0.0
    %vm1088 = vcmp.gt.f32.partialorder %v999, 0.0
    %vm1089 = vcmp.gt.f32.partialorder %v1003, 0.0
    %vm1090 = vcmp.gt.f32.partialorder %v1005, 0.0
    %vm1091 = vcmp.gt.f32.partialorder %v1009, 0.0
    %vm1092 = vcmp.gt.f32.partialorder %v1011, 0.0
    %vm1093 = vcmp.gt.f32.partialorder %v1015, 0.0
    %vm1094 = vcmp.gt.f32.partialorder %v1017, 0.0
    %vm1095 = vcmp.gt.f32.partialorder %v1021, 0.0
    %vm1096 = vcmp.gt.f32.partialorder %v1023, 0.0
    %vm1097 = vcmp.gt.f32.partialorder %v1027, 0.0
    %vm1098 = vcmp.gt.f32.partialorder %v1029, 0.0
    %vm1099 = vcmp.gt.f32.partialorder %v1033, 0.0
    %vm1100 = vcmp.gt.f32.partialorder %v1035, 0.0
    %v1101 = vmul.f32 %v847, 0.2
    %v1102 = vmul.f32 %v849, 0.2
    %v1103 = vmul.f32 %v853, 0.2
    %v1104 = vmul.f32 %v855, 0.2
    %v1105 = vmul.f32 %v859, 0.2
    %v1106 = vmul.f32 %v861, 0.2
    %v1107 = vmul.f32 %v865, 0.2
    %v1108 = vmul.f32 %v867, 0.2
    %v1109 = vmul.f32 %v871, 0.2
    %v1110 = vmul.f32 %v873, 0.2
    %v1111 = vmul.f32 %v877, 0.2
    %v1112 = vmul.f32 %v879, 0.2
    %v1113 = vmul.f32 %v883, 0.2
    %v1114 = vmul.f32 %v885, 0.2
    %v1115 = vmul.f32 %v889, 0.2
    %v1116 = vmul.f32 %v891, 0.2
    %v1117 = vmul.f32 %v895, 0.2
    %v1118 = vmul.f32 %v897, 0.2
    %v1119 = vmul.f32 %v901, 0.2
    %v1120 = vmul.f32 %v903, 0.2
    %v1121 = vmul.f32 %v907, 0.2
    %v1122 = vmul.f32 %v909, 0.2
    %v1123 = vmul.f32 %v913, 0.2
    %v1124 = vmul.f32 %v915, 0.2
    %v1125 = vmul.f32 %v919, 0.2
    %v1126 = vmul.f32 %v921, 0.2
    %v1127 = vmul.f32 %v925, 0.2
    %v1128 = vmul.f32 %v927, 0.2
    %v1129 = vmul.f32 %v931, 0.2
    %v1130 = vmul.f32 %v933, 0.2
    %v1131 = vmul.f32 %v937, 0.2
    %v1132 = vmul.f32 %v939, 0.2
    %v1133 = vmul.f32 %v943, 0.2
    %v1134 = vmul.f32 %v945, 0.2
    %v1135 = vmul.f32 %v949, 0.2
    %v1136 = vmul.f32 %v951, 0.2
    %v1137 = vmul.f32 %v955, 0.2
    %v1138 = vmul.f32 %v957, 0.2
    %v1139 = vmul.f32 %v961, 0.2
    %v1140 = vmul.f32 %v963, 0.2
    %v1141 = vmul.f32 %v967, 0.2
    %v1142 = vmul.f32 %v969, 0.2
    %v1143 = vmul.f32 %v973, 0.2
    %v1144 = vmul.f32 %v975, 0.2
    %v1145 = vmul.f32 %v979, 0.2
    %v1146 = vmul.f32 %v981, 0.2
    %v1147 = vmul.f32 %v985, 0.2
    %v1148 = vmul.f32 %v987, 0.2
    %v1149 = vmul.f32 %v991, 0.2
    %v1150 = vmul.f32 %v993, 0.2
    %v1151 = vmul.f32 %v997, 0.2
    %v1152 = vmul.f32 %v999, 0.2
    %v1153 = vmul.f32 %v1003, 0.2
    %v1154 = vmul.f32 %v1005, 0.2
    %v1155 = vmul.f32 %v1009, 0.2
    %v1156 = vmul.f32 %v1011, 0.2
    %v1157 = vmul.f32 %v1015, 0.2
    %v1158 = vmul.f32 %v1017, 0.2
    %v1159 = vmul.f32 %v1021, 0.2
    %v1160 = vmul.f32 %v1023, 0.2
    %v1161 = vmul.f32 %v1027, 0.2
    %v1162 = vmul.f32 %v1029, 0.2
    %v1163 = vmul.f32 %v1033, 0.2
    %v1164 = vmul.f32 %v1035, 0.2
    %v1165 = vsel %vm1037, %v847, %v1101
    %v1166 = vsel %vm1038, %v849, %v1102
    %v1167 = vsel %vm1039, %v853, %v1103
    %v1168 = vsel %vm1040, %v855, %v1104
    %v1169 = vsel %vm1041, %v859, %v1105
    %v1170 = vsel %vm1042, %v861, %v1106
    %v1171 = vsel %vm1043, %v865, %v1107
    %v1172 = vsel %vm1044, %v867, %v1108
    %v1173 = vsel %vm1045, %v871, %v1109
    %v1174 = vsel %vm1046, %v873, %v1110
    %v1175 = vsel %vm1047, %v877, %v1111
    %v1176 = vsel %vm1048, %v879, %v1112
    %v1177 = vsel %vm1049, %v883, %v1113
    %v1178 = vsel %vm1050, %v885, %v1114
    %v1179 = vsel %vm1051, %v889, %v1115
    %v1180 = vsel %vm1052, %v891, %v1116
    %v1181 = vsel %vm1053, %v895, %v1117
    %v1182 = vsel %vm1054, %v897, %v1118
    %v1183 = vsel %vm1055, %v901, %v1119
    %v1184 = vsel %vm1056, %v903, %v1120
    %v1185 = vsel %vm1057, %v907, %v1121
    %v1186 = vsel %vm1058, %v909, %v1122
    %v1187 = vsel %vm1059, %v913, %v1123
    %v1188 = vsel %vm1060, %v915, %v1124
    %v1189 = vsel %vm1061, %v919, %v1125
    %v1190 = vsel %vm1062, %v921, %v1126
    %v1191 = vsel %vm1063, %v925, %v1127
    %v1192 = vsel %vm1064, %v927, %v1128
    %v1193 = vsel %vm1065, %v931, %v1129
    %v1194 = vsel %vm1066, %v933, %v1130
    %v1195 = vsel %vm1067, %v937, %v1131
    %v1196 = vsel %vm1068, %v939, %v1132
    %v1197 = vsel %vm1069, %v943, %v1133
    %v1198 = vsel %vm1070, %v945, %v1134
    %v1199 = vsel %vm1071, %v949, %v1135
    %v1200 = vsel %vm1072, %v951, %v1136
    %v1201 = vsel %vm1073, %v955, %v1137
    %v1202 = vsel %vm1074, %v957, %v1138
    %v1203 = vsel %vm1075, %v961, %v1139
    %v1204 = vsel %vm1076, %v963, %v1140
    %v1205 = vsel %vm1077, %v967, %v1141
    %v1206 = vsel %vm1078, %v969, %v1142
    %v1207 = vsel %vm1079, %v973, %v1143
    %v1208 = vsel %vm1080, %v975, %v1144
    %v1209 = vsel %vm1081, %v979, %v1145
    %v1210 = vsel %vm1082, %v981, %v1146
    %v1211 = vsel %vm1083, %v985, %v1147
    %v1212 = vsel %vm1084, %v987, %v1148
    %v1213 = vsel %vm1085, %v991, %v1149
    %v1214 = vsel %vm1086, %v993, %v1150
    %v1215 = vsel %vm1087, %v997, %v1151
    %v1216 = vsel %vm1088, %v999, %v1152
    %v1217 = vsel %vm1089, %v1003, %v1153
    %v1218 = vsel %vm1090, %v1005, %v1154
    %v1219 = vsel %vm1091, %v1009, %v1155
    %v1220 = vsel %vm1092, %v1011, %v1156
    %v1221 = vsel %vm1093, %v1015, %v1157
    %v1222 = vsel %vm1094, %v1017, %v1158
    %v1223 = vsel %vm1095, %v1021, %v1159
    %v1224 = vsel %vm1096, %v1023, %v1160
    %v1225 = vsel %vm1097, %v1027, %v1161
    %v1226 = vsel %vm1098, %v1029, %v1162
    %v1227 = vsel %vm1099, %v1033, %v1163
    %v1228 = vsel %vm1100, %v1035, %v1164
    %v1229 = vld [vmem:[#allocation5] sm:$0xff]
    %v1230 = vld [vmem:[#allocation5 + $0x8] sm:$0xff]
    %v1231 = vld [vmem:[#allocation5 + $0x10] sm:$0xff]
    %v1232 = vld [vmem:[#allocation5 + $0x18] sm:$0xff]
    %v1233 = vld [vmem:[#allocation5 + $0x20] sm:$0xff]
    %v1234 = vld [vmem:[#allocation5 + $0x28] sm:$0xff]
    %v1235 = vld [vmem:[#allocation5 + $0x30] sm:$0xff]
    %v1236 = vld [vmem:[#allocation5 + $0x38] sm:$0xff]
    %v1237 = vld [vmem:[#allocation5 + $0x40] sm:$0xff]
    %v1238 = vld [vmem:[#allocation5 + $0x48] sm:$0xff]
    %v1239 = vld [vmem:[#allocation5 + $0x50] sm:$0xff]
    %v1240 = vld [vmem:[#allocation5 + $0x58] sm:$0xff]
    %v1241 = vld [vmem:[#allocation5 + $0x60] sm:$0xff]
    %v1242 = vld [vmem:[#allocation5 + $0x68] sm:$0xff]
    %v1243 = vld [vmem:[#allocation5 + $0x70] sm:$0xff]
    %v1244 = vld [vmem:[#allocation5 + $0x78] sm:$0xff]
    %v1245 = vld [vmem:[#allocation5 + $0x80] sm:$0xff]
    %v1246 = vld [vmem:[#allocation5 + $0x88] sm:$0xff]
    %v1247 = vld [vmem:[#allocation5 + $0x90] sm:$0xff]
    %v1248 = vld [vmem:[#allocation5 + $0x98] sm:$0xff]
    %v1249 = vld [vmem:[#allocation5 + $0xa0] sm:$0xff]
    %v1250 = vld [vmem:[#allocation5 + $0xa8] sm:$0xff]
    %v1251 = vld [vmem:[#allocation5 + $0xb0] sm:$0xff]
    %v1252 = vld [vmem:[#allocation5 + $0xb8] sm:$0xff]
    %v1253 = vld [vmem:[#allocation5 + $0xc0] sm:$0xff]
    %v1254 = vld [vmem:[#allocation5 + $0xc8] sm:$0xff]
    %v1255 = vld [vmem:[#allocation5 + $0xd0] sm:$0xff]
    %v1256 = vld [vmem:[#allocation5 + $0xd8] sm:$0xff]
    %v1257 = vld [vmem:[#allocation5 + $0xe0] sm:$0xff]
    %v1258 = vld [vmem:[#allocation5 + $0xe8] sm:$0xff]
    %v1259 = vld [vmem:[#allocation5 + $0xf0] sm:$0xff]
    %v1260 = vld [vmem:[#allocation5 + $0xf8] sm:$0xff]
    %v1261 = vld [vmem:[#allocation5 + $0x100] sm:$0xff]
    %v1262 = vld [vmem:[#allocation5 + $0x108] sm:$0xff]
    %v1263 = vld [vmem:[#allocation5 + $0x110] sm:$0xff]
    %v1264 = vld [vmem:[#allocation5 + $0x118] sm:$0xff]
    %v1265 = vld [vmem:[#allocation5 + $0x120] sm:$0xff]
    %v1266 = vld [vmem:[#allocation5 + $0x128] sm:$0xff]
    %v1267 = vld [vmem:[#allocation5 + $0x130] sm:$0xff]
    %v1268 = vld [vmem:[#allocation5 + $0x138] sm:$0xff]
    %v1269 = vld [vmem:[#allocation5 + $0x140] sm:$0xff]
    %v1270 = vld [vmem:[#allocation5 + $0x148] sm:$0xff]
    %v1271 = vld [vmem:[#allocation5 + $0x150] sm:$0xff]
    %v1272 = vld [vmem:[#allocation5 + $0x158] sm:$0xff]
    %v1273 = vld [vmem:[#allocation5 + $0x160] sm:$0xff]
    %v1274 = vld [vmem:[#allocation5 + $0x168] sm:$0xff]
    %v1275 = vld [vmem:[#allocation5 + $0x170] sm:$0xff]
    %v1276 = vld [vmem:[#allocation5 + $0x178] sm:$0xff]
    %v1277 = vld [vmem:[#allocation5 + $0x180] sm:$0xff]
    %v1278 = vld [vmem:[#allocation5 + $0x188] sm:$0xff]
    %v1279 = vld [vmem:[#allocation5 + $0x190] sm:$0xff]
    %v1280 = vld [vmem:[#allocation5 + $0x198] sm:$0xff]
    %v1281 = vld [vmem:[#allocation5 + $0x1a0] sm:$0xff]
    %v1282 = vld [vmem:[#allocation5 + $0x1a8] sm:$0xff]
    %v1283 = vld [vmem:[#allocation5 + $0x1b0] sm:$0xff]
    %v1284 = vld [vmem:[#allocation5 + $0x1b8] sm:$0xff]
    %v1285 = vld [vmem:[#allocation5 + $0x1c0] sm:$0xff]
    %v1286 = vld [vmem:[#allocation5 + $0x1c8] sm:$0xff]
    %v1287 = vld [vmem:[#allocation5 + $0x1d0] sm:$0xff]
    %v1288 = vld [vmem:[#allocation5 + $0x1d8] sm:$0xff]
    %v1289 = vld [vmem:[#allocation5 + $0x1e0] sm:$0xff]
    %v1290 = vld [vmem:[#allocation5 + $0x1e8] sm:$0xff]
    %v1291 = vld [vmem:[#allocation5 + $0x1f0] sm:$0xff]
    %v1292 = vld [vmem:[#allocation5 + $0x1f8] sm:$0xff]
    %v1293 = vld [vmem:[%s7] sm:$0x3]
    %v1295 = vlaneseq
    %v1296 = vshrl.u32 %v1295, 7
    %v1297 = vsub.s32 0, %v1296
    %v1298 = vrot.slane %v1293, %v1297
    %v1299 = vlaneseq
    %v1300 = vshrl.u32 %v1299, 7
    %v1301 = vsub.s32 1, %v1300
    %v1302 = vrot.slane %v1293, %v1301
    %1305 = vmatprep.subr.mxu0 %v1260
    %1306 = vmatpush1.msra.mxu0 %v1259
    %1307 = vmatprep.subr.mxu0 %v1258
    %1308 = vmatpush1.msra.mxu0 %v1257
    %1309 = vmatprep.subr.mxu0 %v1256
    %1310 = vmatpush1.msra.mxu0 %v1255
    %1311 = vmatprep.subr.mxu0 %v1254
    %1312 = vmatpush1.msra.mxu0 %v1253
    %1313 = vmatprep.subr.mxu0 %v1252
    %1314 = vmatpush1.msra.mxu0 %v1251
    %1315 = vmatprep.subr.mxu0 %v1250
    %1316 = vmatpush1.msra.mxu0 %v1249
    %1317 = vmatprep.subr.mxu0 %v1248
    %1318 = vmatpush1.msra.mxu0 %v1247
    %1319 = vmatprep.subr.mxu0 %v1246
    %1320 = vmatpush1.msra.mxu0 %v1245
    %1321 = vmatprep.subr.mxu0 %v1244
    %1322 = vmatpush1.msra.mxu0 %v1243
    %1323 = vmatprep.subr.mxu0 %v1242
    %1324 = vmatpush1.msra.mxu0 %v1241
    %1325 = vmatprep.subr.mxu0 %v1240
    %1326 = vmatpush1.msra.mxu0 %v1239
    %1327 = vmatprep.subr.mxu0 %v1238
    %1328 = vmatpush1.msra.mxu0 %v1237
    %1329 = vmatprep.subr.mxu0 %v1236
    %1330 = vmatpush1.msra.mxu0 %v1235
    %1331 = vmatprep.subr.mxu0 %v1234
    %1332 = vmatpush1.msra.mxu0 %v1233
    %1333 = vmatprep.subr.mxu0 %v1232
    %1334 = vmatpush1.msra.mxu0 %v1231
    %1335 = vmatprep.subr.mxu0 %v1230
    %1336 = vmatpush1.msra.mxu0 %v1229
    %1337 = vmatprep.subr.mxu0 %v1292
    %1338 = vmatpush2.msra.mxu0 %v1291
    %1339 = vmatprep.subr.mxu0 %v1290
    %1340 = vmatpush2.msra.mxu0 %v1289
    %1341 = vmatprep.subr.mxu0 %v1288
    %1342 = vmatpush2.msra.mxu0 %v1287
    %1343 = vmatprep.subr.mxu0 %v1286
    %1344 = vmatpush2.msra.mxu0 %v1285
    %1345 = vmatprep.subr.mxu0 %v1284
    %1346 = vmatpush2.msra.mxu0 %v1283
    %1347 = vmatprep.subr.mxu0 %v1282
    %1348 = vmatpush2.msra.mxu0 %v1281
    %1349 = vmatprep.subr.mxu0 %v1280
    %1350 = vmatpush2.msra.mxu0 %v1279
    %1351 = vmatprep.subr.mxu0 %v1278
    %1352 = vmatpush2.msra.mxu0 %v1277
    %1353 = vmatprep.subr.mxu0 %v1276
    %1354 = vmatpush2.msra.mxu0 %v1275
    %1355 = vmatprep.subr.mxu0 %v1274
    %1356 = vmatpush2.msra.mxu0 %v1273
    %1357 = vmatprep.subr.mxu0 %v1272
    %1358 = vmatpush2.msra.mxu0 %v1271
    %1359 = vmatprep.subr.mxu0 %v1270
    %1360 = vmatpush2.msra.mxu0 %v1269
    %1361 = vmatprep.subr.mxu0 %v1268
    %1362 = vmatpush2.msra.mxu0 %v1267
    %1363 = vmatprep.subr.mxu0 %v1266
    %1364 = vmatpush2.msra.mxu0 %v1265
    %1365 = vmatprep.subr.mxu0 %v1264
    %1366 = vmatpush2.msra.mxu0 %v1263
    %1367 = vmatprep.subr.mxu0 %v1262
    %1368 = vmatpush2.msra.mxu0 %v1261
    %1369 = vmatprep.mubr.f32.mxu0 %v1166
    %1370 = vmatmul.mubr.f32.gmra.mxu0 %v1165
    %v1371 = vpop.f32.mrf.mxu0
    %v1372 = vadd.f32 %v1298, %v1371
    %v1373 = vpop.f32.mrf.mxu0
    %v1374 = vadd.f32 %v1302, %v1373
    %1375 = vmatprep.mubr.f32.mxu0 %v1168
    %1376 = vmatmul.mubr.f32.gmra.mxu0 %v1167
    %v1377 = vpop.f32.mrf.mxu0
    %v1378 = vadd.f32 %v1298, %v1377
    %v1379 = vpop.f32.mrf.mxu0
    %v1380 = vadd.f32 %v1302, %v1379
    %1381 = vmatprep.mubr.f32.mxu0 %v1170
    %1382 = vmatmul.mubr.f32.gmra.mxu0 %v1169
    %v1383 = vpop.f32.mrf.mxu0
    %v1384 = vadd.f32 %v1298, %v1383
    %v1385 = vpop.f32.mrf.mxu0
    %v1386 = vadd.f32 %v1302, %v1385
    %1387 = vmatprep.mubr.f32.mxu0 %v1172
    %1388 = vmatmul.mubr.f32.gmra.mxu0 %v1171
    %v1389 = vpop.f32.mrf.mxu0
    %v1390 = vadd.f32 %v1298, %v1389
    %v1391 = vpop.f32.mrf.mxu0
    %v1392 = vadd.f32 %v1302, %v1391
    %1393 = vmatprep.mubr.f32.mxu0 %v1174
    %1394 = vmatmul.mubr.f32.gmra.mxu0 %v1173
    %v1395 = vpop.f32.mrf.mxu0
    %v1396 = vadd.f32 %v1298, %v1395
    %v1397 = vpop.f32.mrf.mxu0
    %v1398 = vadd.f32 %v1302, %v1397
    %1399 = vmatprep.mubr.f32.mxu0 %v1176
    %1400 = vmatmul.mubr.f32.gmra.mxu0 %v1175
    %v1401 = vpop.f32.mrf.mxu0
    %v1402 = vadd.f32 %v1298, %v1401
    %v1403 = vpop.f32.mrf.mxu0
    %v1404 = vadd.f32 %v1302, %v1403
    %1405 = vmatprep.mubr.f32.mxu0 %v1178
    %1406 = vmatmul.mubr.f32.gmra.mxu0 %v1177
    %v1407 = vpop.f32.mrf.mxu0
    %v1408 = vadd.f32 %v1298, %v1407
    %v1409 = vpop.f32.mrf.mxu0
    %v1410 = vadd.f32 %v1302, %v1409
    %1411 = vmatprep.mubr.f32.mxu0 %v1180
    %1412 = vmatmul.mubr.f32.gmra.mxu0 %v1179
    %v1413 = vpop.f32.mrf.mxu0
    %v1414 = vadd.f32 %v1298, %v1413
    %v1415 = vpop.f32.mrf.mxu0
    %v1416 = vadd.f32 %v1302, %v1415
    %1417 = vmatprep.mubr.f32.mxu0 %v1182
    %1418 = vmatmul.mubr.f32.gmra.mxu0 %v1181
    %v1419 = vpop.f32.mrf.mxu0
    %v1420 = vadd.f32 %v1298, %v1419
    %v1421 = vpop.f32.mrf.mxu0
    %v1422 = vadd.f32 %v1302, %v1421
    %1423 = vmatprep.mubr.f32.mxu0 %v1184
    %1424 = vmatmul.mubr.f32.gmra.mxu0 %v1183
    %v1425 = vpop.f32.mrf.mxu0
    %v1426 = vadd.f32 %v1298, %v1425
    %v1427 = vpop.f32.mrf.mxu0
    %v1428 = vadd.f32 %v1302, %v1427
    %1429 = vmatprep.mubr.f32.mxu0 %v1186
    %1430 = vmatmul.mubr.f32.gmra.mxu0 %v1185
    %v1431 = vpop.f32.mrf.mxu0
    %v1432 = vadd.f32 %v1298, %v1431
    %v1433 = vpop.f32.mrf.mxu0
    %v1434 = vadd.f32 %v1302, %v1433
    %1435 = vmatprep.mubr.f32.mxu0 %v1188
    %1436 = vmatmul.mubr.f32.gmra.mxu0 %v1187
    %v1437 = vpop.f32.mrf.mxu0
    %v1438 = vadd.f32 %v1298, %v1437
    %v1439 = vpop.f32.mrf.mxu0
    %v1440 = vadd.f32 %v1302, %v1439
    %1441 = vmatprep.mubr.f32.mxu0 %v1190
    %1442 = vmatmul.mubr.f32.gmra.mxu0 %v1189
    %v1443 = vpop.f32.mrf.mxu0
    %v1444 = vadd.f32 %v1298, %v1443
    %v1445 = vpop.f32.mrf.mxu0
    %v1446 = vadd.f32 %v1302, %v1445
    %1447 = vmatprep.mubr.f32.mxu0 %v1192
    %1448 = vmatmul.mubr.f32.gmra.mxu0 %v1191
    %v1449 = vpop.f32.mrf.mxu0
    %v1450 = vadd.f32 %v1298, %v1449
    %v1451 = vpop.f32.mrf.mxu0
    %v1452 = vadd.f32 %v1302, %v1451
    %1453 = vmatprep.mubr.f32.mxu0 %v1194
    %1454 = vmatmul.mubr.f32.gmra.mxu0 %v1193
    %v1455 = vpop.f32.mrf.mxu0
    %v1456 = vadd.f32 %v1298, %v1455
    %v1457 = vpop.f32.mrf.mxu0
    %v1458 = vadd.f32 %v1302, %v1457
    %1459 = vmatprep.mubr.f32.mxu0 %v1196
    %1460 = vmatmul.mubr.f32.gmra.mxu0 %v1195
    %v1461 = vpop.f32.mrf.mxu0
    %v1462 = vadd.f32 %v1298, %v1461
    %v1463 = vpop.f32.mrf.mxu0
    %v1464 = vadd.f32 %v1302, %v1463
    %1465 = vmatprep.mubr.f32.mxu0 %v1198
    %1466 = vmatmul.mubr.f32.gmra.mxu0 %v1197
    %v1467 = vpop.f32.mrf.mxu0
    %v1468 = vadd.f32 %v1298, %v1467
    %v1469 = vpop.f32.mrf.mxu0
    %v1470 = vadd.f32 %v1302, %v1469
    %1471 = vmatprep.mubr.f32.mxu0 %v1200
    %1472 = vmatmul.mubr.f32.gmra.mxu0 %v1199
    %v1473 = vpop.f32.mrf.mxu0
    %v1474 = vadd.f32 %v1298, %v1473
    %v1475 = vpop.f32.mrf.mxu0
    %v1476 = vadd.f32 %v1302, %v1475
    %1477 = vmatprep.mubr.f32.mxu0 %v1202
    %1478 = vmatmul.mubr.f32.gmra.mxu0 %v1201
    %v1479 = vpop.f32.mrf.mxu0
    %v1480 = vadd.f32 %v1298, %v1479
    %v1481 = vpop.f32.mrf.mxu0
    %v1482 = vadd.f32 %v1302, %v1481
    %1483 = vmatprep.mubr.f32.mxu0 %v1204
    %1484 = vmatmul.mubr.f32.gmra.mxu0 %v1203
    %v1485 = vpop.f32.mrf.mxu0
    %v1486 = vadd.f32 %v1298, %v1485
    %v1487 = vpop.f32.mrf.mxu0
    %v1488 = vadd.f32 %v1302, %v1487
    %1489 = vmatprep.mubr.f32.mxu0 %v1206
    %1490 = vmatmul.mubr.f32.gmra.mxu0 %v1205
    %v1491 = vpop.f32.mrf.mxu0
    %v1492 = vadd.f32 %v1298, %v1491
    %v1493 = vpop.f32.mrf.mxu0
    %v1494 = vadd.f32 %v1302, %v1493
    %1495 = vmatprep.mubr.f32.mxu0 %v1208
    %1496 = vmatmul.mubr.f32.gmra.mxu0 %v1207
    %v1497 = vpop.f32.mrf.mxu0
    %v1498 = vadd.f32 %v1298, %v1497
    %v1499 = vpop.f32.mrf.mxu0
    %v1500 = vadd.f32 %v1302, %v1499
    %1501 = vmatprep.mubr.f32.mxu0 %v1210
    %1502 = vmatmul.mubr.f32.gmra.mxu0 %v1209
    %v1503 = vpop.f32.mrf.mxu0
    %v1504 = vadd.f32 %v1298, %v1503
    %v1505 = vpop.f32.mrf.mxu0
    %v1506 = vadd.f32 %v1302, %v1505
    %1507 = vmatprep.mubr.f32.mxu0 %v1212
    %1508 = vmatmul.mubr.f32.gmra.mxu0 %v1211
    %v1509 = vpop.f32.mrf.mxu0
    %v1510 = vadd.f32 %v1298, %v1509
    %v1511 = vpop.f32.mrf.mxu0
    %v1512 = vadd.f32 %v1302, %v1511
    %1513 = vmatprep.mubr.f32.mxu0 %v1214
    %1514 = vmatmul.mubr.f32.gmra.mxu0 %v1213
    %v1515 = vpop.f32.mrf.mxu0
    %v1516 = vadd.f32 %v1298, %v1515
    %v1517 = vpop.f32.mrf.mxu0
    %v1518 = vadd.f32 %v1302, %v1517
    %1519 = vmatprep.mubr.f32.mxu0 %v1216
    %1520 = vmatmul.mubr.f32.gmra.mxu0 %v1215
    %v1521 = vpop.f32.mrf.mxu0
    %v1522 = vadd.f32 %v1298, %v1521
    %v1523 = vpop.f32.mrf.mxu0
    %v1524 = vadd.f32 %v1302, %v1523
    %1525 = vmatprep.mubr.f32.mxu0 %v1218
    %1526 = vmatmul.mubr.f32.gmra.mxu0 %v1217
    %v1527 = vpop.f32.mrf.mxu0
    %v1528 = vadd.f32 %v1298, %v1527
    %v1529 = vpop.f32.mrf.mxu0
    %v1530 = vadd.f32 %v1302, %v1529
    %1531 = vmatprep.mubr.f32.mxu0 %v1220
    %1532 = vmatmul.mubr.f32.gmra.mxu0 %v1219
    %v1533 = vpop.f32.mrf.mxu0
    %v1534 = vadd.f32 %v1298, %v1533
    %v1535 = vpop.f32.mrf.mxu0
    %v1536 = vadd.f32 %v1302, %v1535
    %1537 = vmatprep.mubr.f32.mxu0 %v1222
    %1538 = vmatmul.mubr.f32.gmra.mxu0 %v1221
    %v1539 = vpop.f32.mrf.mxu0
    %v1540 = vadd.f32 %v1298, %v1539
    %v1541 = vpop.f32.mrf.mxu0
    %v1542 = vadd.f32 %v1302, %v1541
    %1543 = vmatprep.mubr.f32.mxu0 %v1224
    %1544 = vmatmul.mubr.f32.gmra.mxu0 %v1223
    %v1545 = vpop.f32.mrf.mxu0
    %v1546 = vadd.f32 %v1298, %v1545
    %v1547 = vpop.f32.mrf.mxu0
    %v1548 = vadd.f32 %v1302, %v1547
    %1549 = vmatprep.mubr.f32.mxu0 %v1226
    %1550 = vmatmul.mubr.f32.gmra.mxu0 %v1225
    %v1551 = vpop.f32.mrf.mxu0
    %v1552 = vadd.f32 %v1298, %v1551
    %v1553 = vpop.f32.mrf.mxu0
    %v1554 = vadd.f32 %v1302, %v1553
    %1555 = vmatprep.mubr.f32.mxu0 %v1228
    %1556 = vmatmul.mubr.f32.gmra.mxu0 %v1227
    %v1557 = vpop.f32.mrf.mxu0
    %v1558 = vadd.f32 %v1298, %v1557
    %v1559 = vpop.f32.mrf.mxu0
    %v1560 = vadd.f32 %v1302, %v1559
    %1561 = vdwg.mxu0
    %1562 = vst [vmem:[#allocation11] sm:$0xff] %v1372
    %1563 = vst [vmem:[#allocation11 + $0x8] sm:$0xff] %v1374
    %1564 = vst [vmem:[#allocation11 + $0x10] sm:$0xff] %v1378
    %1565 = vst [vmem:[#allocation11 + $0x18] sm:$0xff] %v1380
    %1566 = vst [vmem:[#allocation11 + $0x20] sm:$0xff] %v1384
    %1567 = vst [vmem:[#allocation11 + $0x28] sm:$0xff] %v1386
    %1568 = vst [vmem:[#allocation11 + $0x30] sm:$0xff] %v1390
    %1569 = vst [vmem:[#allocation11 + $0x38] sm:$0xff] %v1392
    %1570 = vst [vmem:[#allocation11 + $0x40] sm:$0xff] %v1396
    %1571 = vst [vmem:[#allocation11 + $0x48] sm:$0xff] %v1398
    %1572 = vst [vmem:[#allocation11 + $0x50] sm:$0xff] %v1402
    %1573 = vst [vmem:[#allocation11 + $0x58] sm:$0xff] %v1404
    %1574 = vst [vmem:[#allocation11 + $0x60] sm:$0xff] %v1408
    %1575 = vst [vmem:[#allocation11 + $0x68] sm:$0xff] %v1410
    %1576 = vst [vmem:[#allocation11 + $0x70] sm:$0xff] %v1414
    %1577 = vst [vmem:[#allocation11 + $0x78] sm:$0xff] %v1416
    %1578 = vst [vmem:[#allocation11 + $0x80] sm:$0xff] %v1420
    %1579 = vst [vmem:[#allocation11 + $0x88] sm:$0xff] %v1422
    %1580 = vst [vmem:[#allocation11 + $0x90] sm:$0xff] %v1426
    %1581 = vst [vmem:[#allocation11 + $0x98] sm:$0xff] %v1428
    %1582 = vst [vmem:[#allocation11 + $0xa0] sm:$0xff] %v1432
    %1583 = vst [vmem:[#allocation11 + $0xa8] sm:$0xff] %v1434
    %1584 = vst [vmem:[#allocation11 + $0xb0] sm:$0xff] %v1438
    %1585 = vst [vmem:[#allocation11 + $0xb8] sm:$0xff] %v1440
    %1586 = vst [vmem:[#allocation11 + $0xc0] sm:$0xff] %v1444
    %1587 = vst [vmem:[#allocation11 + $0xc8] sm:$0xff] %v1446
    %1588 = vst [vmem:[#allocation11 + $0xd0] sm:$0xff] %v1450
    %1589 = vst [vmem:[#allocation11 + $0xd8] sm:$0xff] %v1452
    %1590 = vst [vmem:[#allocation11 + $0xe0] sm:$0xff] %v1456
    %1591 = vst [vmem:[#allocation11 + $0xe8] sm:$0xff] %v1458
    %1592 = vst [vmem:[#allocation11 + $0xf0] sm:$0xff] %v1462
    %1593 = vst [vmem:[#allocation11 + $0xf8] sm:$0xff] %v1464
    %1594 = vst [vmem:[#allocation11 + $0x100] sm:$0xff] %v1468
    %1595 = vst [vmem:[#allocation11 + $0x108] sm:$0xff] %v1470
    %1596 = vst [vmem:[#allocation11 + $0x110] sm:$0xff] %v1474
    %1597 = vst [vmem:[#allocation11 + $0x118] sm:$0xff] %v1476
    %1598 = vst [vmem:[#allocation11 + $0x120] sm:$0xff] %v1480
    %1599 = vst [vmem:[#allocation11 + $0x128] sm:$0xff] %v1482
    %1600 = vst [vmem:[#allocation11 + $0x130] sm:$0xff] %v1486
    %1601 = vst [vmem:[#allocation11 + $0x138] sm:$0xff] %v1488
    %1602 = vst [vmem:[#allocation11 + $0x140] sm:$0xff] %v1492
    %1603 = vst [vmem:[#allocation11 + $0x148] sm:$0xff] %v1494
    %1604 = vst [vmem:[#allocation11 + $0x150] sm:$0xff] %v1498
    %1605 = vst [vmem:[#allocation11 + $0x158] sm:$0xff] %v1500
    %1606 = vst [vmem:[#allocation11 + $0x160] sm:$0xff] %v1504
    %1607 = vst [vmem:[#allocation11 + $0x168] sm:$0xff] %v1506
    %1608 = vst [vmem:[#allocation11 + $0x170] sm:$0xff] %v1510
    %1609 = vst [vmem:[#allocation11 + $0x178] sm:$0xff] %v1512
    %1610 = vst [vmem:[#allocation11 + $0x180] sm:$0xff] %v1516
    %1611 = vst [vmem:[#allocation11 + $0x188] sm:$0xff] %v1518
    %1612 = vst [vmem:[#allocation11 + $0x190] sm:$0xff] %v1522
    %1613 = vst [vmem:[#allocation11 + $0x198] sm:$0xff] %v1524
    %1614 = vst [vmem:[#allocation11 + $0x1a0] sm:$0xff] %v1528
    %1615 = vst [vmem:[#allocation11 + $0x1a8] sm:$0xff] %v1530
    %1616 = vst [vmem:[#allocation11 + $0x1b0] sm:$0xff] %v1534
    %1617 = vst [vmem:[#allocation11 + $0x1b8] sm:$0xff] %v1536
    %1618 = vst [vmem:[#allocation11 + $0x1c0] sm:$0xff] %v1540
    %1619 = vst [vmem:[#allocation11 + $0x1c8] sm:$0xff] %v1542
    %1620 = vst [vmem:[#allocation11 + $0x1d0] sm:$0xff] %v1546
    %1621 = vst [vmem:[#allocation11 + $0x1d8] sm:$0xff] %v1548
    %1622 = vst [vmem:[#allocation11 + $0x1e0] sm:$0xff] %v1552
    %1623 = vst [vmem:[#allocation11 + $0x1e8] sm:$0xff] %v1554
    %1624 = vst [vmem:[#allocation11 + $0x1f0] sm:$0xff] %v1558
    %1625 = vst [vmem:[#allocation11 + $0x1f8] sm:$0xff] %v1560
    %v1626 = vld [vmem:[%s1] sm:$0xff]
    %v1627 = vld [vmem:[%s1 + $0x8] sm:$0xff]
    %v1628 = vld [vmem:[%s1 + $0x10] sm:$0xff]
    %v1629 = vld [vmem:[%s1 + $0x18] sm:$0xff]
    %v1630 = vld [vmem:[%s1 + $0x20] sm:$0xff]
    %v1631 = vld [vmem:[%s1 + $0x28] sm:$0xff]
    %v1632 = vld [vmem:[%s1 + $0x30] sm:$0xff]
    %v1633 = vld [vmem:[%s1 + $0x38] sm:$0xff]
    %v1634 = vld [vmem:[%s1 + $0x40] sm:$0xff]
    %v1635 = vld [vmem:[%s1 + $0x48] sm:$0xff]
    %v1636 = vld [vmem:[%s1 + $0x50] sm:$0xff]
    %v1637 = vld [vmem:[%s1 + $0x58] sm:$0xff]
    %v1638 = vld [vmem:[%s1 + $0x60] sm:$0xff]
    %v1639 = vld [vmem:[%s1 + $0x68] sm:$0xff]
    %v1640 = vld [vmem:[%s1 + $0x70] sm:$0xff]
    %v1641 = vld [vmem:[%s1 + $0x78] sm:$0xff]
    %v1642 = vld [vmem:[%s1 + $0x80] sm:$0xff]
    %v1643 = vld [vmem:[%s1 + $0x88] sm:$0xff]
    %v1644 = vld [vmem:[%s1 + $0x90] sm:$0xff]
    %v1645 = vld [vmem:[%s1 + $0x98] sm:$0xff]
    %v1646 = vld [vmem:[%s1 + $0xa0] sm:$0xff]
    %v1647 = vld [vmem:[%s1 + $0xa8] sm:$0xff]
    %v1648 = vld [vmem:[%s1 + $0xb0] sm:$0xff]
    %v1649 = vld [vmem:[%s1 + $0xb8] sm:$0xff]
    %v1650 = vld [vmem:[%s1 + $0xc0] sm:$0xff]
    %v1651 = vld [vmem:[%s1 + $0xc8] sm:$0xff]
    %v1652 = vld [vmem:[%s1 + $0xd0] sm:$0xff]
    %v1653 = vld [vmem:[%s1 + $0xd8] sm:$0xff]
    %v1654 = vld [vmem:[%s1 + $0xe0] sm:$0xff]
    %v1655 = vld [vmem:[%s1 + $0xe8] sm:$0xff]
    %v1656 = vld [vmem:[%s1 + $0xf0] sm:$0xff]
    %v1657 = vld [vmem:[%s1 + $0xf8] sm:$0xff]
    %v1658 = vmul.f32 %v1374, 0.5
    %v1659 = vmul.f32 %v1380, 0.5
    %v1660 = vmul.f32 %v1386, 0.5
    %v1661 = vmul.f32 %v1392, 0.5
    %v1662 = vmul.f32 %v1398, 0.5
    %v1663 = vmul.f32 %v1404, 0.5
    %v1664 = vmul.f32 %v1410, 0.5
    %v1665 = vmul.f32 %v1416, 0.5
    %v1666 = vmul.f32 %v1422, 0.5
    %v1667 = vmul.f32 %v1428, 0.5
    %v1668 = vmul.f32 %v1434, 0.5
    %v1669 = vmul.f32 %v1440, 0.5
    %v1670 = vmul.f32 %v1446, 0.5
    %v1671 = vmul.f32 %v1452, 0.5
    %v1672 = vmul.f32 %v1458, 0.5
    %v1673 = vmul.f32 %v1464, 0.5
    %v1674 = vmul.f32 %v1470, 0.5
    %v1675 = vmul.f32 %v1476, 0.5
    %v1676 = vmul.f32 %v1482, 0.5
    %v1677 = vmul.f32 %v1488, 0.5
    %v1678 = vmul.f32 %v1494, 0.5
    %v1679 = vmul.f32 %v1500, 0.5
    %v1680 = vmul.f32 %v1506, 0.5
    %v1681 = vmul.f32 %v1512, 0.5
    %v1682 = vmul.f32 %v1518, 0.5
    %v1683 = vmul.f32 %v1524, 0.5
    %v1684 = vmul.f32 %v1530, 0.5
    %v1685 = vmul.f32 %v1536, 0.5
    %v1686 = vmul.f32 %v1542, 0.5
    %v1687 = vmul.f32 %v1548, 0.5
    %v1688 = vmul.f32 %v1554, 0.5
    %v1689 = vmul.f32 %v1560, 0.5
    %v1690 = vmul.f32 %v1658, 1.442695
    %v1691 = vpow.pop %v1690
    %v1692 = vmul.f32 %v1659, 1.442695
    %v1693 = vpow.pop %v1692
    %v1694 = vmul.f32 %v1660, 1.442695
    %v1695 = vpow.pop %v1694
    %v1696 = vmul.f32 %v1661, 1.442695
    %v1697 = vpow.pop %v1696
    %v1698 = vmul.f32 %v1662, 1.442695
    %v1699 = vpow.pop %v1698
    %v1700 = vmul.f32 %v1663, 1.442695
    %v1701 = vpow.pop %v1700
    %v1702 = vmul.f32 %v1664, 1.442695
    %v1703 = vpow.pop %v1702
    %v1704 = vmul.f32 %v1665, 1.442695
    %v1705 = vpow.pop %v1704
    %v1706 = vmul.f32 %v1666, 1.442695
    %v1707 = vpow.pop %v1706
    %v1708 = vmul.f32 %v1667, 1.442695
    %v1709 = vpow.pop %v1708
    %v1710 = vmul.f32 %v1668, 1.442695
    %v1711 = vpow.pop %v1710
    %v1712 = vmul.f32 %v1669, 1.442695
    %v1713 = vpow.pop %v1712
    %v1714 = vmul.f32 %v1670, 1.442695
    %v1715 = vpow.pop %v1714
    %v1716 = vmul.f32 %v1671, 1.442695
    %v1717 = vpow.pop %v1716
    %v1718 = vmul.f32 %v1672, 1.442695
    %v1719 = vpow.pop %v1718
    %v1720 = vmul.f32 %v1673, 1.442695
    %v1721 = vpow.pop %v1720
    %v1722 = vmul.f32 %v1674, 1.442695
    %v1723 = vpow.pop %v1722
    %v1724 = vmul.f32 %v1675, 1.442695
    %v1725 = vpow.pop %v1724
    %v1726 = vmul.f32 %v1676, 1.442695
    %v1727 = vpow.pop %v1726
    %v1728 = vmul.f32 %v1677, 1.442695
    %v1729 = vpow.pop %v1728
    %v1730 = vmul.f32 %v1678, 1.442695
    %v1731 = vpow.pop %v1730
    %v1732 = vmul.f32 %v1679, 1.442695
    %v1733 = vpow.pop %v1732
    %v1734 = vmul.f32 %v1680, 1.442695
    %v1735 = vpow.pop %v1734
    %v1736 = vmul.f32 %v1681, 1.442695
    %v1737 = vpow.pop %v1736
    %v1738 = vmul.f32 %v1682, 1.442695
    %v1739 = vpow.pop %v1738
    %v1740 = vmul.f32 %v1683, 1.442695
    %v1741 = vpow.pop %v1740
    %v1742 = vmul.f32 %v1684, 1.442695
    %v1743 = vpow.pop %v1742
    %v1744 = vmul.f32 %v1685, 1.442695
    %v1745 = vpow.pop %v1744
    %v1746 = vmul.f32 %v1686, 1.442695
    %v1747 = vpow.pop %v1746
    %v1748 = vmul.f32 %v1687, 1.442695
    %v1749 = vpow.pop %v1748
    %v1750 = vmul.f32 %v1688, 1.442695
    %v1751 = vpow.pop %v1750
    %v1752 = vmul.f32 %v1689, 1.442695
    %v1753 = vpow.pop %v1752
    %v1754 = vmul.f32 %v1626, %v1691
    %v1755 = vmul.f32 %v1627, %v1693
    %v1756 = vmul.f32 %v1628, %v1695
    %v1757 = vmul.f32 %v1629, %v1697
    %v1758 = vmul.f32 %v1630, %v1699
    %v1759 = vmul.f32 %v1631, %v1701
    %v1760 = vmul.f32 %v1632, %v1703
    %v1761 = vmul.f32 %v1633, %v1705
    %v1762 = vmul.f32 %v1634, %v1707
    %v1763 = vmul.f32 %v1635, %v1709
    %v1764 = vmul.f32 %v1636, %v1711
    %v1765 = vmul.f32 %v1637, %v1713
    %v1766 = vmul.f32 %v1638, %v1715
    %v1767 = vmul.f32 %v1639, %v1717
    %v1768 = vmul.f32 %v1640, %v1719
    %v1769 = vmul.f32 %v1641, %v1721
    %v1770 = vmul.f32 %v1642, %v1723
    %v1771 = vmul.f32 %v1643, %v1725
    %v1772 = vmul.f32 %v1644, %v1727
    %v1773 = vmul.f32 %v1645, %v1729
    %v1774 = vmul.f32 %v1646, %v1731
    %v1775 = vmul.f32 %v1647, %v1733
    %v1776 = vmul.f32 %v1648, %v1735
    %v1777 = vmul.f32 %v1649, %v1737
    %v1778 = vmul.f32 %v1650, %v1739
    %v1779 = vmul.f32 %v1651, %v1741
    %v1780 = vmul.f32 %v1652, %v1743
    %v1781 = vmul.f32 %v1653, %v1745
    %v1782 = vmul.f32 %v1654, %v1747
    %v1783 = vmul.f32 %v1655, %v1749
    %v1784 = vmul.f32 %v1656, %v1751
    %v1785 = vmul.f32 %v1657, %v1753
    %v1786 = vadd.f32 %v1372, %v1754
    %v1787 = vadd.f32 %v1378, %v1755
    %v1788 = vadd.f32 %v1384, %v1756
    %v1789 = vadd.f32 %v1390, %v1757
    %v1790 = vadd.f32 %v1396, %v1758
    %v1791 = vadd.f32 %v1402, %v1759
    %v1792 = vadd.f32 %v1408, %v1760
    %v1793 = vadd.f32 %v1414, %v1761
    %v1794 = vadd.f32 %v1420, %v1762
    %v1795 = vadd.f32 %v1426, %v1763
    %v1796 = vadd.f32 %v1432, %v1764
    %v1797 = vadd.f32 %v1438, %v1765
    %v1798 = vadd.f32 %v1444, %v1766
    %v1799 = vadd.f32 %v1450, %v1767
    %v1800 = vadd.f32 %v1456, %v1768
    %v1801 = vadd.f32 %v1462, %v1769
    %v1802 = vadd.f32 %v1468, %v1770
    %v1803 = vadd.f32 %v1474, %v1771
    %v1804 = vadd.f32 %v1480, %v1772
    %v1805 = vadd.f32 %v1486, %v1773
    %v1806 = vadd.f32 %v1492, %v1774
    %v1807 = vadd.f32 %v1498, %v1775
    %v1808 = vadd.f32 %v1504, %v1776
    %v1809 = vadd.f32 %v1510, %v1777
    %v1810 = vadd.f32 %v1516, %v1778
    %v1811 = vadd.f32 %v1522, %v1779
    %v1812 = vadd.f32 %v1528, %v1780
    %v1813 = vadd.f32 %v1534, %v1781
    %v1814 = vadd.f32 %v1540, %v1782
    %v1815 = vadd.f32 %v1546, %v1783
    %v1816 = vadd.f32 %v1552, %v1784
    %v1817 = vadd.f32 %v1558, %v1785
    %v1818 = vld [vmem:[%s8] sm:$0x1]
    %v1820 = vlaneseq
    %v1821 = vshrl.u32 %v1820, 7
    %v1822 = vsub.s32 0, %v1821
    %v1823 = vrot.slane %v1818, %v1822
    %v1825 = vmul.f32 %v1786, %v1823
    %v1826 = vmul.f32 %v1787, %v1823
    %v1827 = vmul.f32 %v1788, %v1823
    %v1828 = vmul.f32 %v1789, %v1823
    %v1829 = vmul.f32 %v1790, %v1823
    %v1830 = vmul.f32 %v1791, %v1823
    %v1831 = vmul.f32 %v1792, %v1823
    %v1832 = vmul.f32 %v1793, %v1823
    %v1833 = vmul.f32 %v1794, %v1823
    %v1834 = vmul.f32 %v1795, %v1823
    %v1835 = vmul.f32 %v1796, %v1823
    %v1836 = vmul.f32 %v1797, %v1823
    %v1837 = vmul.f32 %v1798, %v1823
    %v1838 = vmul.f32 %v1799, %v1823
    %v1839 = vmul.f32 %v1800, %v1823
    %v1840 = vmul.f32 %v1801, %v1823
    %v1841 = vmul.f32 %v1802, %v1823
    %v1842 = vmul.f32 %v1803, %v1823
    %v1843 = vmul.f32 %v1804, %v1823
    %v1844 = vmul.f32 %v1805, %v1823
    %v1845 = vmul.f32 %v1806, %v1823
    %v1846 = vmul.f32 %v1807, %v1823
    %v1847 = vmul.f32 %v1808, %v1823
    %v1848 = vmul.f32 %v1809, %v1823
    %v1849 = vmul.f32 %v1810, %v1823
    %v1850 = vmul.f32 %v1811, %v1823
    %v1851 = vmul.f32 %v1812, %v1823
    %v1852 = vmul.f32 %v1813, %v1823
    %v1853 = vmul.f32 %v1814, %v1823
    %v1854 = vmul.f32 %v1815, %v1823
    %v1855 = vmul.f32 %v1816, %v1823
    %v1856 = vmul.f32 %v1817, %v1823
    %v1857 = vld [vmem:[#allocation7] sm:$0xff]
    %v1858 = vld [vmem:[#allocation7 + $0x8] sm:$0xff]
    %v1859 = vld [vmem:[#allocation7 + $0x10] sm:$0xff]
    %v1860 = vld [vmem:[#allocation7 + $0x18] sm:$0xff]
    %v1861 = vld [vmem:[#allocation7 + $0x20] sm:$0xff]
    %v1862 = vld [vmem:[#allocation7 + $0x28] sm:$0xff]
    %v1863 = vld [vmem:[#allocation7 + $0x30] sm:$0xff]
    %v1864 = vld [vmem:[#allocation7 + $0x38] sm:$0xff]
    %v1865 = vld [vmem:[#allocation7 + $0x40] sm:$0xff]
    %v1866 = vld [vmem:[#allocation7 + $0x48] sm:$0xff]
    %v1867 = vld [vmem:[#allocation7 + $0x50] sm:$0xff]
    %v1868 = vld [vmem:[#allocation7 + $0x58] sm:$0xff]
    %v1869 = vld [vmem:[#allocation7 + $0x60] sm:$0xff]
    %v1870 = vld [vmem:[#allocation7 + $0x68] sm:$0xff]
    %v1871 = vld [vmem:[#allocation7 + $0x70] sm:$0xff]
    %v1872 = vld [vmem:[#allocation7 + $0x78] sm:$0xff]
    %v1873 = vld [vmem:[#allocation7 + $0x80] sm:$0xff]
    %v1874 = vld [vmem:[#allocation7 + $0x88] sm:$0xff]
    %v1875 = vld [vmem:[#allocation7 + $0x90] sm:$0xff]
    %v1876 = vld [vmem:[#allocation7 + $0x98] sm:$0xff]
    %v1877 = vld [vmem:[#allocation7 + $0xa0] sm:$0xff]
    %v1878 = vld [vmem:[#allocation7 + $0xa8] sm:$0xff]
    %v1879 = vld [vmem:[#allocation7 + $0xb0] sm:$0xff]
    %v1880 = vld [vmem:[#allocation7 + $0xb8] sm:$0xff]
    %v1881 = vld [vmem:[#allocation7 + $0xc0] sm:$0xff]
    %v1882 = vld [vmem:[#allocation7 + $0xc8] sm:$0xff]
    %v1883 = vld [vmem:[#allocation7 + $0xd0] sm:$0xff]
    %v1884 = vld [vmem:[#allocation7 + $0xd8] sm:$0xff]
    %v1885 = vld [vmem:[#allocation7 + $0xe0] sm:$0xff]
    %v1886 = vld [vmem:[#allocation7 + $0xe8] sm:$0xff]
    %v1887 = vld [vmem:[#allocation7 + $0xf0] sm:$0xff]
    %v1888 = vld [vmem:[#allocation7 + $0xf8] sm:$0xff]
    %v1889 = vld [vmem:[%s10] sm:$0x3]
    %v1891 = vlaneseq
    %v1892 = vshrl.u32 %v1891, 7
    %v1893 = vsub.s32 0, %v1892
    %v1894 = vrot.slane %v1889, %v1893
    %v1895 = vlaneseq
    %v1896 = vshrl.u32 %v1895, 7
    %v1897 = vsub.s32 1, %v1896
    %v1898 = vrot.slane %v1889, %v1897
    %1901 = vmatprep.subr.mxu0 %v1888
    %1902 = vmatpush1.msra.mxu0 %v1887
    %1903 = vmatprep.subr.mxu0 %v1886
    %1904 = vmatpush1.msra.mxu0 %v1885
    %1905 = vmatprep.subr.mxu0 %v1884
    %1906 = vmatpush1.msra.mxu0 %v1883
    %1907 = vmatprep.subr.mxu0 %v1882
    %1908 = vmatpush1.msra.mxu0 %v1881
    %1909 = vmatprep.subr.mxu0 %v1880
    %1910 = vmatpush1.msra.mxu0 %v1879
    %1911 = vmatprep.subr.mxu0 %v1878
    %1912 = vmatpush1.msra.mxu0 %v1877
    %1913 = vmatprep.subr.mxu0 %v1876
    %1914 = vmatpush1.msra.mxu0 %v1875
    %1915 = vmatprep.subr.mxu0 %v1874
    %1916 = vmatpush1.msra.mxu0 %v1873
    %1917 = vmatprep.subr.mxu0 %v1872
    %1918 = vmatpush1.msra.mxu0 %v1871
    %1919 = vmatprep.subr.mxu0 %v1870
    %1920 = vmatpush1.msra.mxu0 %v1869
    %1921 = vmatprep.subr.mxu0 %v1868
    %1922 = vmatpush1.msra.mxu0 %v1867
    %1923 = vmatprep.subr.mxu0 %v1866
    %1924 = vmatpush1.msra.mxu0 %v1865
    %1925 = vmatprep.subr.mxu0 %v1864
    %1926 = vmatpush1.msra.mxu0 %v1863
    %1927 = vmatprep.subr.mxu0 %v1862
    %1928 = vmatpush1.msra.mxu0 %v1861
    %1929 = vmatprep.subr.mxu0 %v1860
    %1930 = vmatpush1.msra.mxu0 %v1859
    %1931 = vmatprep.subr.mxu0 %v1858
    %1932 = vmatpush1.msra.mxu0 %v1857
    %1933 = vmatprep.subr.mxu0 0.0
    %1934 = vmatpush2.msra.mxu0 0.0
    %1935 = vmatprep.subr.mxu0 0.0
    %1936 = vmatpush2.msra.mxu0 0.0
    %1937 = vmatprep.subr.mxu0 0.0
    %1938 = vmatpush2.msra.mxu0 0.0
    %1939 = vmatprep.subr.mxu0 0.0
    %1940 = vmatpush2.msra.mxu0 0.0
    %1941 = vmatprep.subr.mxu0 0.0
    %1942 = vmatpush2.msra.mxu0 0.0
    %1943 = vmatprep.subr.mxu0 0.0
    %1944 = vmatpush2.msra.mxu0 0.0
    %1945 = vmatprep.subr.mxu0 0.0
    %1946 = vmatpush2.msra.mxu0 0.0
    %1947 = vmatprep.subr.mxu0 0.0
    %1948 = vmatpush2.msra.mxu0 0.0
    %1949 = vmatprep.subr.mxu0 0.0
    %1950 = vmatpush2.msra.mxu0 0.0
    %1951 = vmatprep.subr.mxu0 0.0
    %1952 = vmatpush2.msra.mxu0 0.0
    %1953 = vmatprep.subr.mxu0 0.0
    %1954 = vmatpush2.msra.mxu0 0.0
    %1955 = vmatprep.subr.mxu0 0.0
    %1956 = vmatpush2.msra.mxu0 0.0
    %1957 = vmatprep.subr.mxu0 0.0
    %1958 = vmatpush2.msra.mxu0 0.0
    %1959 = vmatprep.subr.mxu0 0.0
    %1960 = vmatpush2.msra.mxu0 0.0
    %1961 = vmatprep.subr.mxu0 0.0
    %1962 = vmatpush2.msra.mxu0 0.0
    %1963 = vmatprep.subr.mxu0 0.0
    %1964 = vmatpush2.msra.mxu0 0.0
    %1965 = vmatprep.mubr.f32.mxu0 0.0
    %1966 = vmatmul.mubr.f32.gmra.mxu0 %v1825
    %v1967 = vpop.f32.mrf.mxu0
    %v1968 = vadd.f32 %v1894, %v1967
    %v1969 = vpop.f32.mrf.mxu0
    %v1970 = vadd.f32 %v1898, %v1969
    %1971 = vmatprep.mubr.f32.mxu0 0.0
    %1972 = vmatmul.mubr.f32.gmra.mxu0 %v1826
    %v1973 = vpop.f32.mrf.mxu0
    %v1974 = vadd.f32 %v1894, %v1973
    %v1975 = vpop.f32.mrf.mxu0
    %v1976 = vadd.f32 %v1898, %v1975
    %1977 = vmatprep.mubr.f32.mxu0 0.0
    %1978 = vmatmul.mubr.f32.gmra.mxu0 %v1827
    %v1979 = vpop.f32.mrf.mxu0
    %v1980 = vadd.f32 %v1894, %v1979
    %v1981 = vpop.f32.mrf.mxu0
    %v1982 = vadd.f32 %v1898, %v1981
    %1983 = vmatprep.mubr.f32.mxu0 0.0
    %1984 = vmatmul.mubr.f32.gmra.mxu0 %v1828
    %v1985 = vpop.f32.mrf.mxu0
    %v1986 = vadd.f32 %v1894, %v1985
    %v1987 = vpop.f32.mrf.mxu0
    %v1988 = vadd.f32 %v1898, %v1987
    %1989 = vmatprep.mubr.f32.mxu0 0.0
    %1990 = vmatmul.mubr.f32.gmra.mxu0 %v1829
    %v1991 = vpop.f32.mrf.mxu0
    %v1992 = vadd.f32 %v1894, %v1991
    %v1993 = vpop.f32.mrf.mxu0
    %v1994 = vadd.f32 %v1898, %v1993
    %1995 = vmatprep.mubr.f32.mxu0 0.0
    %1996 = vmatmul.mubr.f32.gmra.mxu0 %v1830
    %v1997 = vpop.f32.mrf.mxu0
    %v1998 = vadd.f32 %v1894, %v1997
    %v1999 = vpop.f32.mrf.mxu0
    %v2000 = vadd.f32 %v1898, %v1999
    %2001 = vmatprep.mubr.f32.mxu0 0.0
    %2002 = vmatmul.mubr.f32.gmra.mxu0 %v1831
    %v2003 = vpop.f32.mrf.mxu0
    %v2004 = vadd.f32 %v1894, %v2003
    %v2005 = vpop.f32.mrf.mxu0
    %v2006 = vadd.f32 %v1898, %v2005
    %2007 = vmatprep.mubr.f32.mxu0 0.0
    %2008 = vmatmul.mubr.f32.gmra.mxu0 %v1832
    %v2009 = vpop.f32.mrf.mxu0
    %v2010 = vadd.f32 %v1894, %v2009
    %v2011 = vpop.f32.mrf.mxu0
    %v2012 = vadd.f32 %v1898, %v2011
    %2013 = vmatprep.mubr.f32.mxu0 0.0
    %2014 = vmatmul.mubr.f32.gmra.mxu0 %v1833
    %v2015 = vpop.f32.mrf.mxu0
    %v2016 = vadd.f32 %v1894, %v2015
    %v2017 = vpop.f32.mrf.mxu0
    %v2018 = vadd.f32 %v1898, %v2017
    %2019 = vmatprep.mubr.f32.mxu0 0.0
    %2020 = vmatmul.mubr.f32.gmra.mxu0 %v1834
    %v2021 = vpop.f32.mrf.mxu0
    %v2022 = vadd.f32 %v1894, %v2021
    %v2023 = vpop.f32.mrf.mxu0
    %v2024 = vadd.f32 %v1898, %v2023
    %2025 = vmatprep.mubr.f32.mxu0 0.0
    %2026 = vmatmul.mubr.f32.gmra.mxu0 %v1835
    %v2027 = vpop.f32.mrf.mxu0
    %v2028 = vadd.f32 %v1894, %v2027
    %v2029 = vpop.f32.mrf.mxu0
    %v2030 = vadd.f32 %v1898, %v2029
    %2031 = vmatprep.mubr.f32.mxu0 0.0
    %2032 = vmatmul.mubr.f32.gmra.mxu0 %v1836
    %v2033 = vpop.f32.mrf.mxu0
    %v2034 = vadd.f32 %v1894, %v2033
    %v2035 = vpop.f32.mrf.mxu0
    %v2036 = vadd.f32 %v1898, %v2035
    %2037 = vmatprep.mubr.f32.mxu0 0.0
    %2038 = vmatmul.mubr.f32.gmra.mxu0 %v1837
    %v2039 = vpop.f32.mrf.mxu0
    %v2040 = vadd.f32 %v1894, %v2039
    %v2041 = vpop.f32.mrf.mxu0
    %v2042 = vadd.f32 %v1898, %v2041
    %2043 = vmatprep.mubr.f32.mxu0 0.0
    %2044 = vmatmul.mubr.f32.gmra.mxu0 %v1838
    %v2045 = vpop.f32.mrf.mxu0
    %v2046 = vadd.f32 %v1894, %v2045
    %v2047 = vpop.f32.mrf.mxu0
    %v2048 = vadd.f32 %v1898, %v2047
    %2049 = vmatprep.mubr.f32.mxu0 0.0
    %2050 = vmatmul.mubr.f32.gmra.mxu0 %v1839
    %v2051 = vpop.f32.mrf.mxu0
    %v2052 = vadd.f32 %v1894, %v2051
    %v2053 = vpop.f32.mrf.mxu0
    %v2054 = vadd.f32 %v1898, %v2053
    %2055 = vmatprep.mubr.f32.mxu0 0.0
    %2056 = vmatmul.mubr.f32.gmra.mxu0 %v1840
    %v2057 = vpop.f32.mrf.mxu0
    %v2058 = vadd.f32 %v1894, %v2057
    %v2059 = vpop.f32.mrf.mxu0
    %v2060 = vadd.f32 %v1898, %v2059
    %2061 = vmatprep.mubr.f32.mxu0 0.0
    %2062 = vmatmul.mubr.f32.gmra.mxu0 %v1841
    %v2063 = vpop.f32.mrf.mxu0
    %v2064 = vadd.f32 %v1894, %v2063
    %v2065 = vpop.f32.mrf.mxu0
    %v2066 = vadd.f32 %v1898, %v2065
    %2067 = vmatprep.mubr.f32.mxu0 0.0
    %2068 = vmatmul.mubr.f32.gmra.mxu0 %v1842
    %v2069 = vpop.f32.mrf.mxu0
    %v2070 = vadd.f32 %v1894, %v2069
    %v2071 = vpop.f32.mrf.mxu0
    %v2072 = vadd.f32 %v1898, %v2071
    %2073 = vmatprep.mubr.f32.mxu0 0.0
    %2074 = vmatmul.mubr.f32.gmra.mxu0 %v1843
    %v2075 = vpop.f32.mrf.mxu0
    %v2076 = vadd.f32 %v1894, %v2075
    %v2077 = vpop.f32.mrf.mxu0
    %v2078 = vadd.f32 %v1898, %v2077
    %2079 = vmatprep.mubr.f32.mxu0 0.0
    %2080 = vmatmul.mubr.f32.gmra.mxu0 %v1844
    %v2081 = vpop.f32.mrf.mxu0
    %v2082 = vadd.f32 %v1894, %v2081
    %v2083 = vpop.f32.mrf.mxu0
    %v2084 = vadd.f32 %v1898, %v2083
    %2085 = vmatprep.mubr.f32.mxu0 0.0
    %2086 = vmatmul.mubr.f32.gmra.mxu0 %v1845
    %v2087 = vpop.f32.mrf.mxu0
    %v2088 = vadd.f32 %v1894, %v2087
    %v2089 = vpop.f32.mrf.mxu0
    %v2090 = vadd.f32 %v1898, %v2089
    %2091 = vmatprep.mubr.f32.mxu0 0.0
    %2092 = vmatmul.mubr.f32.gmra.mxu0 %v1846
    %v2093 = vpop.f32.mrf.mxu0
    %v2094 = vadd.f32 %v1894, %v2093
    %v2095 = vpop.f32.mrf.mxu0
    %v2096 = vadd.f32 %v1898, %v2095
    %2097 = vmatprep.mubr.f32.mxu0 0.0
    %2098 = vmatmul.mubr.f32.gmra.mxu0 %v1847
    %v2099 = vpop.f32.mrf.mxu0
    %v2100 = vadd.f32 %v1894, %v2099
    %v2101 = vpop.f32.mrf.mxu0
    %v2102 = vadd.f32 %v1898, %v2101
    %2103 = vmatprep.mubr.f32.mxu0 0.0
    %2104 = vmatmul.mubr.f32.gmra.mxu0 %v1848
    %v2105 = vpop.f32.mrf.mxu0
    %v2106 = vadd.f32 %v1894, %v2105
    %v2107 = vpop.f32.mrf.mxu0
    %v2108 = vadd.f32 %v1898, %v2107
    %2109 = vmatprep.mubr.f32.mxu0 0.0
    %2110 = vmatmul.mubr.f32.gmra.mxu0 %v1849
    %v2111 = vpop.f32.mrf.mxu0
    %v2112 = vadd.f32 %v1894, %v2111
    %v2113 = vpop.f32.mrf.mxu0
    %v2114 = vadd.f32 %v1898, %v2113
    %2115 = vmatprep.mubr.f32.mxu0 0.0
    %2116 = vmatmul.mubr.f32.gmra.mxu0 %v1850
    %v2117 = vpop.f32.mrf.mxu0
    %v2118 = vadd.f32 %v1894, %v2117
    %v2119 = vpop.f32.mrf.mxu0
    %v2120 = vadd.f32 %v1898, %v2119
    %2121 = vmatprep.mubr.f32.mxu0 0.0
    %2122 = vmatmul.mubr.f32.gmra.mxu0 %v1851
    %v2123 = vpop.f32.mrf.mxu0
    %v2124 = vadd.f32 %v1894, %v2123
    %v2125 = vpop.f32.mrf.mxu0
    %v2126 = vadd.f32 %v1898, %v2125
    %2127 = vmatprep.mubr.f32.mxu0 0.0
    %2128 = vmatmul.mubr.f32.gmra.mxu0 %v1852
    %v2129 = vpop.f32.mrf.mxu0
    %v2130 = vadd.f32 %v1894, %v2129
    %v2131 = vpop.f32.mrf.mxu0
    %v2132 = vadd.f32 %v1898, %v2131
    %2133 = vmatprep.mubr.f32.mxu0 0.0
    %2134 = vmatmul.mubr.f32.gmra.mxu0 %v1853
    %v2135 = vpop.f32.mrf.mxu0
    %v2136 = vadd.f32 %v1894, %v2135
    %v2137 = vpop.f32.mrf.mxu0
    %v2138 = vadd.f32 %v1898, %v2137
    %2139 = vmatprep.mubr.f32.mxu0 0.0
    %2140 = vmatmul.mubr.f32.gmra.mxu0 %v1854
    %v2141 = vpop.f32.mrf.mxu0
    %v2142 = vadd.f32 %v1894, %v2141
    %v2143 = vpop.f32.mrf.mxu0
    %v2144 = vadd.f32 %v1898, %v2143
    %2145 = vmatprep.mubr.f32.mxu0 0.0
    %2146 = vmatmul.mubr.f32.gmra.mxu0 %v1855
    %v2147 = vpop.f32.mrf.mxu0
    %v2148 = vadd.f32 %v1894, %v2147
    %v2149 = vpop.f32.mrf.mxu0
    %v2150 = vadd.f32 %v1898, %v2149
    %2151 = vmatprep.mubr.f32.mxu0 0.0
    %2152 = vmatmul.mubr.f32.gmra.mxu0 %v1856
    %v2153 = vpop.f32.mrf.mxu0
    %v2154 = vadd.f32 %v1894, %v2153
    %v2155 = vpop.f32.mrf.mxu0
    %v2156 = vadd.f32 %v1898, %v2155
    %2157 = vdwg.mxu0
    %vm2158 = vcmp.gt.f32.partialorder %v1968, 0.0
    %vm2159 = vcmp.gt.f32.partialorder %v1970, 0.0
    %vm2160 = vcmp.gt.f32.partialorder %v1974, 0.0
    %vm2161 = vcmp.gt.f32.partialorder %v1976, 0.0
    %vm2162 = vcmp.gt.f32.partialorder %v1980, 0.0
    %vm2163 = vcmp.gt.f32.partialorder %v1982, 0.0
    %vm2164 = vcmp.gt.f32.partialorder %v1986, 0.0
    %vm2165 = vcmp.gt.f32.partialorder %v1988, 0.0
    %vm2166 = vcmp.gt.f32.partialorder %v1992, 0.0
    %vm2167 = vcmp.gt.f32.partialorder %v1994, 0.0
    %vm2168 = vcmp.gt.f32.partialorder %v1998, 0.0
    %vm2169 = vcmp.gt.f32.partialorder %v2000, 0.0
    %vm2170 = vcmp.gt.f32.partialorder %v2004, 0.0
    %vm2171 = vcmp.gt.f32.partialorder %v2006, 0.0
    %vm2172 = vcmp.gt.f32.partialorder %v2010, 0.0
    %vm2173 = vcmp.gt.f32.partialorder %v2012, 0.0
    %vm2174 = vcmp.gt.f32.partialorder %v2016, 0.0
    %vm2175 = vcmp.gt.f32.partialorder %v2018, 0.0
    %vm2176 = vcmp.gt.f32.partialorder %v2022, 0.0
    %vm2177 = vcmp.gt.f32.partialorder %v2024, 0.0
    %vm2178 = vcmp.gt.f32.partialorder %v2028, 0.0
    %vm2179 = vcmp.gt.f32.partialorder %v2030, 0.0
    %vm2180 = vcmp.gt.f32.partialorder %v2034, 0.0
    %vm2181 = vcmp.gt.f32.partialorder %v2036, 0.0
    %vm2182 = vcmp.gt.f32.partialorder %v2040, 0.0
    %vm2183 = vcmp.gt.f32.partialorder %v2042, 0.0
    %vm2184 = vcmp.gt.f32.partialorder %v2046, 0.0
    %vm2185 = vcmp.gt.f32.partialorder %v2048, 0.0
    %vm2186 = vcmp.gt.f32.partialorder %v2052, 0.0
    %vm2187 = vcmp.gt.f32.partialorder %v2054, 0.0
    %vm2188 = vcmp.gt.f32.partialorder %v2058, 0.0
    %vm2189 = vcmp.gt.f32.partialorder %v2060, 0.0
    %vm2190 = vcmp.gt.f32.partialorder %v2064, 0.0
    %vm2191 = vcmp.gt.f32.partialorder %v2066, 0.0
    %vm2192 = vcmp.gt.f32.partialorder %v2070, 0.0
    %vm2193 = vcmp.gt.f32.partialorder %v2072, 0.0
    %vm2194 = vcmp.gt.f32.partialorder %v2076, 0.0
    %vm2195 = vcmp.gt.f32.partialorder %v2078, 0.0
    %vm2196 = vcmp.gt.f32.partialorder %v2082, 0.0
    %vm2197 = vcmp.gt.f32.partialorder %v2084, 0.0
    %vm2198 = vcmp.gt.f32.partialorder %v2088, 0.0
    %vm2199 = vcmp.gt.f32.partialorder %v2090, 0.0
    %vm2200 = vcmp.gt.f32.partialorder %v2094, 0.0
    %vm2201 = vcmp.gt.f32.partialorder %v2096, 0.0
    %vm2202 = vcmp.gt.f32.partialorder %v2100, 0.0
    %vm2203 = vcmp.gt.f32.partialorder %v2102, 0.0
    %vm2204 = vcmp.gt.f32.partialorder %v2106, 0.0
    %vm2205 = vcmp.gt.f32.partialorder %v2108, 0.0
    %vm2206 = vcmp.gt.f32.partialorder %v2112, 0.0
    %vm2207 = vcmp.gt.f32.partialorder %v2114, 0.0
    %vm2208 = vcmp.gt.f32.partialorder %v2118, 0.0
    %vm2209 = vcmp.gt.f32.partialorder %v2120, 0.0
    %vm2210 = vcmp.gt.f32.partialorder %v2124, 0.0
    %vm2211 = vcmp.gt.f32.partialorder %v2126, 0.0
    %vm2212 = vcmp.gt.f32.partialorder %v2130, 0.0
    %vm2213 = vcmp.gt.f32.partialorder %v2132, 0.0
    %vm2214 = vcmp.gt.f32.partialorder %v2136, 0.0
    %vm2215 = vcmp.gt.f32.partialorder %v2138, 0.0
    %vm2216 = vcmp.gt.f32.partialorder %v2142, 0.0
    %vm2217 = vcmp.gt.f32.partialorder %v2144, 0.0
    %vm2218 = vcmp.gt.f32.partialorder %v2148, 0.0
    %vm2219 = vcmp.gt.f32.partialorder %v2150, 0.0
    %vm2220 = vcmp.gt.f32.partialorder %v2154, 0.0
    %vm2221 = vcmp.gt.f32.partialorder %v2156, 0.0
    %v2222 = vmul.f32 %v1968, 0.2
    %v2223 = vmul.f32 %v1970, 0.2
    %v2224 = vmul.f32 %v1974, 0.2
    %v2225 = vmul.f32 %v1976, 0.2
    %v2226 = vmul.f32 %v1980, 0.2
    %v2227 = vmul.f32 %v1982, 0.2
    %v2228 = vmul.f32 %v1986, 0.2
    %v2229 = vmul.f32 %v1988, 0.2
    %v2230 = vmul.f32 %v1992, 0.2
    %v2231 = vmul.f32 %v1994, 0.2
    %v2232 = vmul.f32 %v1998, 0.2
    %v2233 = vmul.f32 %v2000, 0.2
    %v2234 = vmul.f32 %v2004, 0.2
    %v2235 = vmul.f32 %v2006, 0.2
    %v2236 = vmul.f32 %v2010, 0.2
    %v2237 = vmul.f32 %v2012, 0.2
    %v2238 = vmul.f32 %v2016, 0.2
    %v2239 = vmul.f32 %v2018, 0.2
    %v2240 = vmul.f32 %v2022, 0.2
    %v2241 = vmul.f32 %v2024, 0.2
    %v2242 = vmul.f32 %v2028, 0.2
    %v2243 = vmul.f32 %v2030, 0.2
    %v2244 = vmul.f32 %v2034, 0.2
    %v2245 = vmul.f32 %v2036, 0.2
    %v2246 = vmul.f32 %v2040, 0.2
    %v2247 = vmul.f32 %v2042, 0.2
    %v2248 = vmul.f32 %v2046, 0.2
    %v2249 = vmul.f32 %v2048, 0.2
    %v2250 = vmul.f32 %v2052, 0.2
    %v2251 = vmul.f32 %v2054, 0.2
    %v2252 = vmul.f32 %v2058, 0.2
    %v2253 = vmul.f32 %v2060, 0.2
    %v2254 = vmul.f32 %v2064, 0.2
    %v2255 = vmul.f32 %v2066, 0.2
    %v2256 = vmul.f32 %v2070, 0.2
    %v2257 = vmul.f32 %v2072, 0.2
    %v2258 = vmul.f32 %v2076, 0.2
    %v2259 = vmul.f32 %v2078, 0.2
    %v2260 = vmul.f32 %v2082, 0.2
    %v2261 = vmul.f32 %v2084, 0.2
    %v2262 = vmul.f32 %v2088, 0.2
    %v2263 = vmul.f32 %v2090, 0.2
    %v2264 = vmul.f32 %v2094, 0.2
    %v2265 = vmul.f32 %v2096, 0.2
    %v2266 = vmul.f32 %v2100, 0.2
    %v2267 = vmul.f32 %v2102, 0.2
    %v2268 = vmul.f32 %v2106, 0.2
    %v2269 = vmul.f32 %v2108, 0.2
    %v2270 = vmul.f32 %v2112, 0.2
    %v2271 = vmul.f32 %v2114, 0.2
    %v2272 = vmul.f32 %v2118, 0.2
    %v2273 = vmul.f32 %v2120, 0.2
    %v2274 = vmul.f32 %v2124, 0.2
    %v2275 = vmul.f32 %v2126, 0.2
    %v2276 = vmul.f32 %v2130, 0.2
    %v2277 = vmul.f32 %v2132, 0.2
    %v2278 = vmul.f32 %v2136, 0.2
    %v2279 = vmul.f32 %v2138, 0.2
    %v2280 = vmul.f32 %v2142, 0.2
    %v2281 = vmul.f32 %v2144, 0.2
    %v2282 = vmul.f32 %v2148, 0.2
    %v2283 = vmul.f32 %v2150, 0.2
    %v2284 = vmul.f32 %v2154, 0.2
    %v2285 = vmul.f32 %v2156, 0.2
    %v2286 = vsel %vm2158, %v1968, %v2222
    %v2287 = vsel %vm2159, %v1970, %v2223
    %v2288 = vsel %vm2160, %v1974, %v2224
    %v2289 = vsel %vm2161, %v1976, %v2225
    %v2290 = vsel %vm2162, %v1980, %v2226
    %v2291 = vsel %vm2163, %v1982, %v2227
    %v2292 = vsel %vm2164, %v1986, %v2228
    %v2293 = vsel %vm2165, %v1988, %v2229
    %v2294 = vsel %vm2166, %v1992, %v2230
    %v2295 = vsel %vm2167, %v1994, %v2231
    %v2296 = vsel %vm2168, %v1998, %v2232
    %v2297 = vsel %vm2169, %v2000, %v2233
    %v2298 = vsel %vm2170, %v2004, %v2234
    %v2299 = vsel %vm2171, %v2006, %v2235
    %v2300 = vsel %vm2172, %v2010, %v2236
    %v2301 = vsel %vm2173, %v2012, %v2237
    %v2302 = vsel %vm2174, %v2016, %v2238
    %v2303 = vsel %vm2175, %v2018, %v2239
    %v2304 = vsel %vm2176, %v2022, %v2240
    %v2305 = vsel %vm2177, %v2024, %v2241
    %v2306 = vsel %vm2178, %v2028, %v2242
    %v2307 = vsel %vm2179, %v2030, %v2243
    %v2308 = vsel %vm2180, %v2034, %v2244
    %v2309 = vsel %vm2181, %v2036, %v2245
    %v2310 = vsel %vm2182, %v2040, %v2246
    %v2311 = vsel %vm2183, %v2042, %v2247
    %v2312 = vsel %vm2184, %v2046, %v2248
    %v2313 = vsel %vm2185, %v2048, %v2249
    %v2314 = vsel %vm2186, %v2052, %v2250
    %v2315 = vsel %vm2187, %v2054, %v2251
    %v2316 = vsel %vm2188, %v2058, %v2252
    %v2317 = vsel %vm2189, %v2060, %v2253
    %v2318 = vsel %vm2190, %v2064, %v2254
    %v2319 = vsel %vm2191, %v2066, %v2255
    %v2320 = vsel %vm2192, %v2070, %v2256
    %v2321 = vsel %vm2193, %v2072, %v2257
    %v2322 = vsel %vm2194, %v2076, %v2258
    %v2323 = vsel %vm2195, %v2078, %v2259
    %v2324 = vsel %vm2196, %v2082, %v2260
    %v2325 = vsel %vm2197, %v2084, %v2261
    %v2326 = vsel %vm2198, %v2088, %v2262
    %v2327 = vsel %vm2199, %v2090, %v2263
    %v2328 = vsel %vm2200, %v2094, %v2264
    %v2329 = vsel %vm2201, %v2096, %v2265
    %v2330 = vsel %vm2202, %v2100, %v2266
    %v2331 = vsel %vm2203, %v2102, %v2267
    %v2332 = vsel %vm2204, %v2106, %v2268
    %v2333 = vsel %vm2205, %v2108, %v2269
    %v2334 = vsel %vm2206, %v2112, %v2270
    %v2335 = vsel %vm2207, %v2114, %v2271
    %v2336 = vsel %vm2208, %v2118, %v2272
    %v2337 = vsel %vm2209, %v2120, %v2273
    %v2338 = vsel %vm2210, %v2124, %v2274
    %v2339 = vsel %vm2211, %v2126, %v2275
    %v2340 = vsel %vm2212, %v2130, %v2276
    %v2341 = vsel %vm2213, %v2132, %v2277
    %v2342 = vsel %vm2214, %v2136, %v2278
    %v2343 = vsel %vm2215, %v2138, %v2279
    %v2344 = vsel %vm2216, %v2142, %v2280
    %v2345 = vsel %vm2217, %v2144, %v2281
    %v2346 = vsel %vm2218, %v2148, %v2282
    %v2347 = vsel %vm2219, %v2150, %v2283
    %v2348 = vsel %vm2220, %v2154, %v2284
    %v2349 = vsel %vm2221, %v2156, %v2285
    %v2350 = vld [vmem:[#allocation8] sm:$0xff]
    %v2351 = vld [vmem:[#allocation8 + $0x8] sm:$0xff]
    %v2352 = vld [vmem:[#allocation8 + $0x10] sm:$0xff]
    %v2353 = vld [vmem:[#allocation8 + $0x18] sm:$0xff]
    %v2354 = vld [vmem:[#allocation8 + $0x20] sm:$0xff]
    %v2355 = vld [vmem:[#allocation8 + $0x28] sm:$0xff]
    %v2356 = vld [vmem:[#allocation8 + $0x30] sm:$0xff]
    %v2357 = vld [vmem:[#allocation8 + $0x38] sm:$0xff]
    %v2358 = vld [vmem:[#allocation8 + $0x40] sm:$0xff]
    %v2359 = vld [vmem:[#allocation8 + $0x48] sm:$0xff]
    %v2360 = vld [vmem:[#allocation8 + $0x50] sm:$0xff]
    %v2361 = vld [vmem:[#allocation8 + $0x58] sm:$0xff]
    %v2362 = vld [vmem:[#allocation8 + $0x60] sm:$0xff]
    %v2363 = vld [vmem:[#allocation8 + $0x68] sm:$0xff]
    %v2364 = vld [vmem:[#allocation8 + $0x70] sm:$0xff]
    %v2365 = vld [vmem:[#allocation8 + $0x78] sm:$0xff]
    %v2366 = vld [vmem:[#allocation8 + $0x80] sm:$0xff]
    %v2367 = vld [vmem:[#allocation8 + $0x88] sm:$0xff]
    %v2368 = vld [vmem:[#allocation8 + $0x90] sm:$0xff]
    %v2369 = vld [vmem:[#allocation8 + $0x98] sm:$0xff]
    %v2370 = vld [vmem:[#allocation8 + $0xa0] sm:$0xff]
    %v2371 = vld [vmem:[#allocation8 + $0xa8] sm:$0xff]
    %v2372 = vld [vmem:[#allocation8 + $0xb0] sm:$0xff]
    %v2373 = vld [vmem:[#allocation8 + $0xb8] sm:$0xff]
    %v2374 = vld [vmem:[#allocation8 + $0xc0] sm:$0xff]
    %v2375 = vld [vmem:[#allocation8 + $0xc8] sm:$0xff]
    %v2376 = vld [vmem:[#allocation8 + $0xd0] sm:$0xff]
    %v2377 = vld [vmem:[#allocation8 + $0xd8] sm:$0xff]
    %v2378 = vld [vmem:[#allocation8 + $0xe0] sm:$0xff]
    %v2379 = vld [vmem:[#allocation8 + $0xe8] sm:$0xff]
    %v2380 = vld [vmem:[#allocation8 + $0xf0] sm:$0xff]
    %v2381 = vld [vmem:[#allocation8 + $0xf8] sm:$0xff]
    %v2382 = vld [vmem:[%s12] sm:$0x1]
    %v2384 = vlaneseq
    %v2385 = vshrl.u32 %v2384, 7
    %v2386 = vsub.s32 0, %v2385
    %v2387 = vrot.slane %v2382, %v2386
    %2389 = vmatprep.subr.mxu0 0.0
    %2390 = vmatpush1.msra.mxu0 %v2365
    %2391 = vmatprep.subr.mxu0 0.0
    %2392 = vmatpush1.msra.mxu0 %v2364
    %2393 = vmatprep.subr.mxu0 0.0
    %2394 = vmatpush1.msra.mxu0 %v2363
    %2395 = vmatprep.subr.mxu0 0.0
    %2396 = vmatpush1.msra.mxu0 %v2362
    %2397 = vmatprep.subr.mxu0 0.0
    %2398 = vmatpush1.msra.mxu0 %v2361
    %2399 = vmatprep.subr.mxu0 0.0
    %2400 = vmatpush1.msra.mxu0 %v2360
    %2401 = vmatprep.subr.mxu0 0.0
    %2402 = vmatpush1.msra.mxu0 %v2359
    %2403 = vmatprep.subr.mxu0 0.0
    %2404 = vmatpush1.msra.mxu0 %v2358
    %2405 = vmatprep.subr.mxu0 0.0
    %2406 = vmatpush1.msra.mxu0 %v2357
    %2407 = vmatprep.subr.mxu0 0.0
    %2408 = vmatpush1.msra.mxu0 %v2356
    %2409 = vmatprep.subr.mxu0 0.0
    %2410 = vmatpush1.msra.mxu0 %v2355
    %2411 = vmatprep.subr.mxu0 0.0
    %2412 = vmatpush1.msra.mxu0 %v2354
    %2413 = vmatprep.subr.mxu0 0.0
    %2414 = vmatpush1.msra.mxu0 %v2353
    %2415 = vmatprep.subr.mxu0 0.0
    %2416 = vmatpush1.msra.mxu0 %v2352
    %2417 = vmatprep.subr.mxu0 0.0
    %2418 = vmatpush1.msra.mxu0 %v2351
    %2419 = vmatprep.subr.mxu0 0.0
    %2420 = vmatpush1.msra.mxu0 %v2350
    %2421 = vmatprep.subr.mxu0 0.0
    %2422 = vmatpush2.msra.mxu0 %v2381
    %2423 = vmatprep.subr.mxu0 0.0
    %2424 = vmatpush2.msra.mxu0 %v2380
    %2425 = vmatprep.subr.mxu0 0.0
    %2426 = vmatpush2.msra.mxu0 %v2379
    %2427 = vmatprep.subr.mxu0 0.0
    %2428 = vmatpush2.msra.mxu0 %v2378
    %2429 = vmatprep.subr.mxu0 0.0
    %2430 = vmatpush2.msra.mxu0 %v2377
    %2431 = vmatprep.subr.mxu0 0.0
    %2432 = vmatpush2.msra.mxu0 %v2376
    %2433 = vmatprep.subr.mxu0 0.0
    %2434 = vmatpush2.msra.mxu0 %v2375
    %2435 = vmatprep.subr.mxu0 0.0
    %2436 = vmatpush2.msra.mxu0 %v2374
    %2437 = vmatprep.subr.mxu0 0.0
    %2438 = vmatpush2.msra.mxu0 %v2373
    %2439 = vmatprep.subr.mxu0 0.0
    %2440 = vmatpush2.msra.mxu0 %v2372
    %2441 = vmatprep.subr.mxu0 0.0
    %2442 = vmatpush2.msra.mxu0 %v2371
    %2443 = vmatprep.subr.mxu0 0.0
    %2444 = vmatpush2.msra.mxu0 %v2370
    %2445 = vmatprep.subr.mxu0 0.0
    %2446 = vmatpush2.msra.mxu0 %v2369
    %2447 = vmatprep.subr.mxu0 0.0
    %2448 = vmatpush2.msra.mxu0 %v2368
    %2449 = vmatprep.subr.mxu0 0.0
    %2450 = vmatpush2.msra.mxu0 %v2367
    %2451 = vmatprep.subr.mxu0 0.0
    %2452 = vmatpush2.msra.mxu0 %v2366
    %2453 = vmatprep.mubr.f32.mxu0 %v2287
    %2454 = vmatmul.mubr.f32.gmra.mxu0 %v2286
    %v2455 = vpop.f32.mrf.mxu0
    %v2456 = vadd.f32 %v2387, %v2455
    %v2457 = vpop.f32.mrf.mxu0
    %2458 = vmatprep.mubr.f32.mxu0 %v2289
    %2459 = vmatmul.mubr.f32.gmra.mxu0 %v2288
    %v2460 = vpop.f32.mrf.mxu0
    %v2461 = vadd.f32 %v2387, %v2460
    %v2462 = vpop.f32.mrf.mxu0
    %2463 = vmatprep.mubr.f32.mxu0 %v2291
    %2464 = vmatmul.mubr.f32.gmra.mxu0 %v2290
    %v2465 = vpop.f32.mrf.mxu0
    %v2466 = vadd.f32 %v2387, %v2465
    %v2467 = vpop.f32.mrf.mxu0
    %2468 = vmatprep.mubr.f32.mxu0 %v2293
    %2469 = vmatmul.mubr.f32.gmra.mxu0 %v2292
    %v2470 = vpop.f32.mrf.mxu0
    %v2471 = vadd.f32 %v2387, %v2470
    %v2472 = vpop.f32.mrf.mxu0
    %2473 = vmatprep.mubr.f32.mxu0 %v2295
    %2474 = vmatmul.mubr.f32.gmra.mxu0 %v2294
    %v2475 = vpop.f32.mrf.mxu0
    %v2476 = vadd.f32 %v2387, %v2475
    %v2477 = vpop.f32.mrf.mxu0
    %2478 = vmatprep.mubr.f32.mxu0 %v2297
    %2479 = vmatmul.mubr.f32.gmra.mxu0 %v2296
    %v2480 = vpop.f32.mrf.mxu0
    %v2481 = vadd.f32 %v2387, %v2480
    %v2482 = vpop.f32.mrf.mxu0
    %2483 = vmatprep.mubr.f32.mxu0 %v2299
    %2484 = vmatmul.mubr.f32.gmra.mxu0 %v2298
    %v2485 = vpop.f32.mrf.mxu0
    %v2486 = vadd.f32 %v2387, %v2485
    %v2487 = vpop.f32.mrf.mxu0
    %2488 = vmatprep.mubr.f32.mxu0 %v2301
    %2489 = vmatmul.mubr.f32.gmra.mxu0 %v2300
    %v2490 = vpop.f32.mrf.mxu0
    %v2491 = vadd.f32 %v2387, %v2490
    %v2492 = vpop.f32.mrf.mxu0
    %2493 = vmatprep.mubr.f32.mxu0 %v2303
    %2494 = vmatmul.mubr.f32.gmra.mxu0 %v2302
    %v2495 = vpop.f32.mrf.mxu0
    %v2496 = vadd.f32 %v2387, %v2495
    %v2497 = vpop.f32.mrf.mxu0
    %2498 = vmatprep.mubr.f32.mxu0 %v2305
    %2499 = vmatmul.mubr.f32.gmra.mxu0 %v2304
    %v2500 = vpop.f32.mrf.mxu0
    %v2501 = vadd.f32 %v2387, %v2500
    %v2502 = vpop.f32.mrf.mxu0
    %2503 = vmatprep.mubr.f32.mxu0 %v2307
    %2504 = vmatmul.mubr.f32.gmra.mxu0 %v2306
    %v2505 = vpop.f32.mrf.mxu0
    %v2506 = vadd.f32 %v2387, %v2505
    %v2507 = vpop.f32.mrf.mxu0
    %2508 = vmatprep.mubr.f32.mxu0 %v2309
    %2509 = vmatmul.mubr.f32.gmra.mxu0 %v2308
    %v2510 = vpop.f32.mrf.mxu0
    %v2511 = vadd.f32 %v2387, %v2510
    %v2512 = vpop.f32.mrf.mxu0
    %2513 = vmatprep.mubr.f32.mxu0 %v2311
    %2514 = vmatmul.mubr.f32.gmra.mxu0 %v2310
    %v2515 = vpop.f32.mrf.mxu0
    %v2516 = vadd.f32 %v2387, %v2515
    %v2517 = vpop.f32.mrf.mxu0
    %2518 = vmatprep.mubr.f32.mxu0 %v2313
    %2519 = vmatmul.mubr.f32.gmra.mxu0 %v2312
    %v2520 = vpop.f32.mrf.mxu0
    %v2521 = vadd.f32 %v2387, %v2520
    %v2522 = vpop.f32.mrf.mxu0
    %2523 = vmatprep.mubr.f32.mxu0 %v2315
    %2524 = vmatmul.mubr.f32.gmra.mxu0 %v2314
    %v2525 = vpop.f32.mrf.mxu0
    %v2526 = vadd.f32 %v2387, %v2525
    %v2527 = vpop.f32.mrf.mxu0
    %2528 = vmatprep.mubr.f32.mxu0 %v2317
    %2529 = vmatmul.mubr.f32.gmra.mxu0 %v2316
    %v2530 = vpop.f32.mrf.mxu0
    %v2531 = vadd.f32 %v2387, %v2530
    %v2532 = vpop.f32.mrf.mxu0
    %2533 = vmatprep.mubr.f32.mxu0 %v2319
    %2534 = vmatmul.mubr.f32.gmra.mxu0 %v2318
    %v2535 = vpop.f32.mrf.mxu0
    %v2536 = vadd.f32 %v2387, %v2535
    %v2537 = vpop.f32.mrf.mxu0
    %2538 = vmatprep.mubr.f32.mxu0 %v2321
    %2539 = vmatmul.mubr.f32.gmra.mxu0 %v2320
    %v2540 = vpop.f32.mrf.mxu0
    %v2541 = vadd.f32 %v2387, %v2540
    %v2542 = vpop.f32.mrf.mxu0
    %2543 = vmatprep.mubr.f32.mxu0 %v2323
    %2544 = vmatmul.mubr.f32.gmra.mxu0 %v2322
    %v2545 = vpop.f32.mrf.mxu0
    %v2546 = vadd.f32 %v2387, %v2545
    %v2547 = vpop.f32.mrf.mxu0
    %2548 = vmatprep.mubr.f32.mxu0 %v2325
    %2549 = vmatmul.mubr.f32.gmra.mxu0 %v2324
    %v2550 = vpop.f32.mrf.mxu0
    %v2551 = vadd.f32 %v2387, %v2550
    %v2552 = vpop.f32.mrf.mxu0
    %2553 = vmatprep.mubr.f32.mxu0 %v2327
    %2554 = vmatmul.mubr.f32.gmra.mxu0 %v2326
    %v2555 = vpop.f32.mrf.mxu0
    %v2556 = vadd.f32 %v2387, %v2555
    %v2557 = vpop.f32.mrf.mxu0
    %2558 = vmatprep.mubr.f32.mxu0 %v2329
    %2559 = vmatmul.mubr.f32.gmra.mxu0 %v2328
    %v2560 = vpop.f32.mrf.mxu0
    %v2561 = vadd.f32 %v2387, %v2560
    %v2562 = vpop.f32.mrf.mxu0
    %2563 = vmatprep.mubr.f32.mxu0 %v2331
    %2564 = vmatmul.mubr.f32.gmra.mxu0 %v2330
    %v2565 = vpop.f32.mrf.mxu0
    %v2566 = vadd.f32 %v2387, %v2565
    %v2567 = vpop.f32.mrf.mxu0
    %2568 = vmatprep.mubr.f32.mxu0 %v2333
    %2569 = vmatmul.mubr.f32.gmra.mxu0 %v2332
    %v2570 = vpop.f32.mrf.mxu0
    %v2571 = vadd.f32 %v2387, %v2570
    %v2572 = vpop.f32.mrf.mxu0
    %2573 = vmatprep.mubr.f32.mxu0 %v2335
    %2574 = vmatmul.mubr.f32.gmra.mxu0 %v2334
    %v2575 = vpop.f32.mrf.mxu0
    %v2576 = vadd.f32 %v2387, %v2575
    %v2577 = vpop.f32.mrf.mxu0
    %2578 = vmatprep.mubr.f32.mxu0 %v2337
    %2579 = vmatmul.mubr.f32.gmra.mxu0 %v2336
    %v2580 = vpop.f32.mrf.mxu0
    %v2581 = vadd.f32 %v2387, %v2580
    %v2582 = vpop.f32.mrf.mxu0
    %2583 = vmatprep.mubr.f32.mxu0 %v2339
    %2584 = vmatmul.mubr.f32.gmra.mxu0 %v2338
    %v2585 = vpop.f32.mrf.mxu0
    %v2586 = vadd.f32 %v2387, %v2585
    %v2587 = vpop.f32.mrf.mxu0
    %2588 = vmatprep.mubr.f32.mxu0 %v2341
    %2589 = vmatmul.mubr.f32.gmra.mxu0 %v2340
    %v2590 = vpop.f32.mrf.mxu0
    %v2591 = vadd.f32 %v2387, %v2590
    %v2592 = vpop.f32.mrf.mxu0
    %2593 = vmatprep.mubr.f32.mxu0 %v2343
    %2594 = vmatmul.mubr.f32.gmra.mxu0 %v2342
    %v2595 = vpop.f32.mrf.mxu0
    %v2596 = vadd.f32 %v2387, %v2595
    %v2597 = vpop.f32.mrf.mxu0
    %2598 = vmatprep.mubr.f32.mxu0 %v2345
    %2599 = vmatmul.mubr.f32.gmra.mxu0 %v2344
    %v2600 = vpop.f32.mrf.mxu0
    %v2601 = vadd.f32 %v2387, %v2600
    %v2602 = vpop.f32.mrf.mxu0
    %2603 = vmatprep.mubr.f32.mxu0 %v2347
    %2604 = vmatmul.mubr.f32.gmra.mxu0 %v2346
    %v2605 = vpop.f32.mrf.mxu0
    %v2606 = vadd.f32 %v2387, %v2605
    %v2607 = vpop.f32.mrf.mxu0
    %2608 = vmatprep.mubr.f32.mxu0 %v2349
    %2609 = vmatmul.mubr.f32.gmra.mxu0 %v2348
    %v2610 = vpop.f32.mrf.mxu0
    %v2611 = vadd.f32 %v2387, %v2610
    %v2612 = vpop.f32.mrf.mxu0
    %2613 = vdwg.mxu0
    %2614 = vst [vmem:[#allocation10] sm:$0xff] %v2456
    %2615 = vst [vmem:[#allocation10 + $0x8] sm:$0xff] %v2461
    %2616 = vst [vmem:[#allocation10 + $0x10] sm:$0xff] %v2466
    %2617 = vst [vmem:[#allocation10 + $0x18] sm:$0xff] %v2471
    %2618 = vst [vmem:[#allocation10 + $0x20] sm:$0xff] %v2476
    %2619 = vst [vmem:[#allocation10 + $0x28] sm:$0xff] %v2481
    %2620 = vst [vmem:[#allocation10 + $0x30] sm:$0xff] %v2486
    %2621 = vst [vmem:[#allocation10 + $0x38] sm:$0xff] %v2491
    %2622 = vst [vmem:[#allocation10 + $0x40] sm:$0xff] %v2496
    %2623 = vst [vmem:[#allocation10 + $0x48] sm:$0xff] %v2501
    %2624 = vst [vmem:[#allocation10 + $0x50] sm:$0xff] %v2506
    %2625 = vst [vmem:[#allocation10 + $0x58] sm:$0xff] %v2511
    %2626 = vst [vmem:[#allocation10 + $0x60] sm:$0xff] %v2516
    %2627 = vst [vmem:[#allocation10 + $0x68] sm:$0xff] %v2521
    %2628 = vst [vmem:[#allocation10 + $0x70] sm:$0xff] %v2526
    %2629 = vst [vmem:[#allocation10 + $0x78] sm:$0xff] %v2531
    %2630 = vst [vmem:[#allocation10 + $0x80] sm:$0xff] %v2536
    %2631 = vst [vmem:[#allocation10 + $0x88] sm:$0xff] %v2541
    %2632 = vst [vmem:[#allocation10 + $0x90] sm:$0xff] %v2546
    %2633 = vst [vmem:[#allocation10 + $0x98] sm:$0xff] %v2551
    %2634 = vst [vmem:[#allocation10 + $0xa0] sm:$0xff] %v2556
    %2635 = vst [vmem:[#allocation10 + $0xa8] sm:$0xff] %v2561
    %2636 = vst [vmem:[#allocation10 + $0xb0] sm:$0xff] %v2566
    %2637 = vst [vmem:[#allocation10 + $0xb8] sm:$0xff] %v2571
    %2638 = vst [vmem:[#allocation10 + $0xc0] sm:$0xff] %v2576
    %2639 = vst [vmem:[#allocation10 + $0xc8] sm:$0xff] %v2581
    %2640 = vst [vmem:[#allocation10 + $0xd0] sm:$0xff] %v2586
    %2641 = vst [vmem:[#allocation10 + $0xd8] sm:$0xff] %v2591
    %2642 = vst [vmem:[#allocation10 + $0xe0] sm:$0xff] %v2596
    %2643 = vst [vmem:[#allocation10 + $0xe8] sm:$0xff] %v2601
    %2644 = vst [vmem:[#allocation10 + $0xf0] sm:$0xff] %v2606
    %2645 = vst [vmem:[#allocation10 + $0xf8] sm:$0xff] %v2611
    // Predicated region
    $region70: #{tpu_custom_call.1} parent=1 // pred_check
      _
    $region71: #{tpu_custom_call.1} parent=1 // pred_check_branch
      %2647 = sbr.rel (0) target = $region73
    $region72: #{tpu_custom_call.1} parent=1 // pred_region
      %s2649 = ssub.s32 4096, 4096
      %2650 = vsyncadd [#allocation4], %s2649
      %s2651 = sshll.u32 [#allocation10], 4
      %s2652 = int_to_ptr.vmem [resolvable:$true] %s2651
      %2657 = dma.vmem_to_hbm [thread:$0]  %s2652, 4096, %s13, [#allocation4], 128, 128, 8
    $region73: #{tpu_custom_call.1} parent=1 // pred_fallthru
      _
    // Predicated region
    $region74: #{tpu_custom_call.1} parent=1 // pred_check
      _
    $region75: #{tpu_custom_call.1} parent=1 // pred_check_branch
      %2659 = sbr.rel (0) target = $region77
    $region76: #{tpu_custom_call.1} parent=1 // pred_region
      %s2661 = ssub.s32 8192, 8192
      %2662 = vsyncadd [#allocation12], %s2661
      %s2663 = sshll.u32 [#allocation11], 4
      %s2664 = int_to_ptr.vmem [resolvable:$true] %s2663
      %2669 = dma.vmem_to_hbm [thread:$0]  %s2664, 8192, %s14, [#allocation12], 256, 256, 16
    $region77: #{tpu_custom_call.1} parent=1 // pred_fallthru
      _
    // Predicated region
    $region78: #{tpu_custom_call.1} parent=1 // pred_check
      _
    $region79: #{tpu_custom_call.1} parent=1 // pred_check_branch
      %2671 = sbr.rel (0) target = $region81
    $region80: #{tpu_custom_call.1} parent=1 // pred_region
      %2672 = dma.done [#allocation4], 4096
    $region81: #{tpu_custom_call.1} parent=1 // pred_fallthru
      _
    // Predicated region
    $region82: #{tpu_custom_call.1} parent=1 // pred_check
      _
    $region83: #{tpu_custom_call.1} parent=1 // pred_check_branch
      %2674 = sbr.rel (0) target = $region85
    $region84: #{tpu_custom_call.1} parent=1 // pred_region
      %2675 = dma.done [#allocation12], 8192
    $region85: #{tpu_custom_call.1} parent=1 // pred_fallthru
      _
    %2676 = vsyncpa [#allocation3], 1
    %2677 = vsyncpa [#allocation6], 1
    %2678 = vsyncpa [#allocation9], 1
    %2679 = vsyncpa [#allocation4], 1
    %2680 = vsyncpa [#allocation12], 1

</llo_original>
